<compile_context>
chip_gen: v5e
topology: v5e:2x2
jax: 0.10.0
libtpu: 0.0.40
codegen_flags: <defaults>
</compile_context>

<pallas_src>
import math
import functools

import jax
import jax.numpy as jnp
from jax.experimental import pallas as pl
from jax.experimental.pallas import tpu as pltpu

# ------------------------- tiny-BERT config (synthetic) -------------------------
HIDDEN = 32
N_HEADS = 4
HEAD_DIM = HIDDEN // N_HEADS
N_LAYERS = 2
INTERMEDIATE = 64
VOCAB = 128
MAX_POS = 16
TYPE_VOCAB = 2
LN_EPS = 1e-12

_VEC_ROWS = 2 + 8 * N_LAYERS + 1   # emb ln (2) + 8 per layer + classify bias


# --------------------------------- helpers --------------------------------------
def _layernorm_f32(x, g, b):
    mu = jnp.mean(x, axis=-1, keepdims=True)
    var = jnp.mean(jnp.square(x - mu), axis=-1, keepdims=True)
    return (x - mu) * jax.lax.rsqrt(var + LN_EPS) * g + b


def _mm(a, w_bf16):
    # bf16 MXU matmul, f32 accumulation.
    return jnp.dot(a.astype(jnp.bfloat16), w_bf16, preferred_element_type=jnp.float32)


def _full_spec(a):
    nd = a.ndim
    return pl.BlockSpec(a.shape, lambda i: (0,) * nd)


# ------------------------------- fused Pallas kernel ----------------------------
def _bert_forward_kernel(ids_ref, tt_ref, mask_ref, pos_ref,
                         wemb_ref, temb_ref, vecs_ref,
                         wqkv_ref, wo_ref, wi_ref, wout_ref, wc_ref,
                         o_ref, *, batch, seq):
    m = batch * seq
    vecs = vecs_ref[...]                                   # [19, 128] f32 packed biases/LN

    def vec(row, n):                                       # static slice -> [1, n]
        return vecs[row:row + 1, :n]

    # ---- embeddings: word gather as one-hot MXU matmul, type via 2-way select ----
    ids = ids_ref[...]                                     # [M, 1] int32
    vocab_iota = jax.lax.broadcasted_iota(jnp.int32, (m, VOCAB), 1)
    one_hot = (vocab_iota == ids).astype(jnp.float32)      # [M, V]
    word_e = jnp.dot(one_hot, wemb_ref[...], preferred_element_type=jnp.float32)  # exact

    tt = tt_ref[...].astype(jnp.float32)                   # [M, 1]
    # TODO(synk): select assumes TYPE_VOCAB == 2 (as in BERT); general case needs a gather.
    type_e = temb_ref[0:1, :] * (1.0 - tt) + temb_ref[1:2, :] * tt                # [M, H]

    x = _layernorm_f32(word_e + type_e + pos_ref[...], vec(0, HIDDEN), vec(1, HIDDEN))

    # additive key-padding mask, materialized once (hoisted out of the head loop)
    # fully-masked rows become uniform attention rather than NaN (fine for padding)
    add_mask = jnp.broadcast_to(mask_ref[...][:, None, :], (batch, seq, seq))     # [B,S,S]

    for l in range(N_LAYERS):
        base = 2 + 8 * l
        # fused QKV projection: one MXU matmul [M,H] x [H,3H] (1/sqrt(Dh) folded into Wq)
        qkv = _mm(x, wqkv_ref[l]) + vec(base + 0, 3 * HIDDEN)                     # [M, 3H]
        qkv3 = qkv.reshape(batch, seq, 3 * HIDDEN)

        ctx_parts = []
        for h in range(N_HEADS):
            c0 = h * HEAD_DIM
            q_h = qkv3[:, :, c0:c0 + HEAD_DIM].astype(jnp.bfloat16)
            k_h = qkv3[:, :, HIDDEN + c0:HIDDEN + c0 + HEAD_DIM].astype(jnp.bfloat16)
            v_h = qkv3[:, :, 2 * HIDDEN + c0:2 * HIDDEN + c0 + HEAD_DIM].astype(jnp.bfloat16)

            s = jnp.einsum("bqd,bkd->bqk", q_h, k_h,
                           preferred_element_type=jnp.float32) + add_mask         # [B,S,S]
            s = s - jnp.max(s, axis=-1, keepdims=True)
            p = jnp.exp(s)
            p = p / jnp.sum(p, axis=-1, keepdims=True)     # exact softmax normalization
            ctx = jnp.einsum("bqk,bkd->bqd", p.astype(jnp.bfloat16), v_h,
                             preferred_element_type=jnp.float32)                  # [B,S,Dh]
            ctx_parts.append(ctx.reshape(m, HEAD_DIM))

        # concat(heads) -> ONE K=HIDDEN output-projection matmul
        attn = _mm(jnp.concatenate(ctx_parts, axis=1), wo_ref[l]) + vec(base + 1, HIDDEN)
        x1 = _layernorm_f32(x + attn, vec(base + 2, HIDDEN), vec(base + 3, HIDDEN))

        # FFN (GELU) + residual + LayerNorm 2
        hmid = _mm(x1, wi_ref[l]) + vec(base + 4, INTERMEDIATE)
        # TODO(synk): HF BERT uses exact erf GELU; tanh-approx GELU used here.
        hmid = jax.nn.gelu(hmid, approximate=True)
        ffn = _mm(hmid, wout_ref[l]) + vec(base + 5, HIDDEN)
        x = _layernorm_f32(x1 + ffn, vec(base + 6, HIDDEN), vec(base + 7, HIDDEN))

    # ---- classify + softmax(dim=-1); lane-dense [M, 128] store ----
    logits = _mm(x, wc_ref[...]) + vec(2 + 8 * N_LAYERS, VOCAB)                   # [M, V]
    z = logits - jnp.max(logits, axis=-1, keepdims=True)
    e = jnp.exp(z)
    o_ref[...] = (e / jnp.sum(e, axis=-1, keepdims=True)).astype(o_ref.dtype)


def _bert_pallas(ids, tt, neg_mask, pos, wemb, temb, vecs,
                 wqkv, wo, wi, wout, wc, *, batch, seq):
    m = batch * seq
    args = (ids, tt, neg_mask, pos, wemb, temb, vecs, wqkv, wo, wi, wout, wc)
    kernel = functools.partial(_bert_forward_kernel, batch=batch, seq=seq)
    return pl.pallas_call(
        kernel,
        out_shape=jax.ShapeDtypeStruct((m, VOCAB), jnp.float32),
        grid=(1,),
        in_specs=[_full_spec(a) for a in args],
        out_specs=pl.BlockSpec((m, VOCAB), lambda i: (0, 0)),
        compiler_params=pltpu.CompilerParams(dimension_semantics=("arbitrary",)),
    )(*args)


# ----------------------------- parameters (synthetic) ---------------------------
def init_params(key):
    def nrm(k, shape, scale=0.02):
        return scale * jax.random.normal(k, shape, jnp.float32)

    keys = iter(jax.random.split(key, 4 + 6 * N_LAYERS))
    params = {
        "word_emb": nrm(next(keys), (VOCAB, HIDDEN)),
        "pos_emb": nrm(next(keys), (MAX_POS, HIDDEN)),
        "type_emb": nrm(next(keys), (TYPE_VOCAB, HIDDEN)),
        "emb_ln_g": jnp.ones((HIDDEN,), jnp.float32),
        "emb_ln_b": jnp.zeros((HIDDEN,), jnp.float32),
        # classify Linear(hidden_size, vocab_size), stored as [H, V]
        "Wc": nrm(next(keys), (HIDDEN, VOCAB)),
        "bc": jnp.zeros((VOCAB,), jnp.float32),
        "layers": [],
    }
    for _ in range(N_LAYERS):
        params["layers"].append({
            "Wq": nrm(next(keys), (HIDDEN, HIDDEN)), "bq": jnp.zeros((HIDDEN,), jnp.float32),
            "Wk": nrm(next(keys), (HIDDEN, HIDDEN)), "bk": jnp.zeros((HIDDEN,), jnp.float32),
            "Wv": nrm(next(keys), (HIDDEN, HIDDEN)), "bv": jnp.zeros((HIDDEN,), jnp.float32),
            "Wo": nrm(next(keys), (HIDDEN, HIDDEN)), "bo": jnp.zeros((HIDDEN,), jnp.float32),
            "ln1_g": jnp.ones((HIDDEN,), jnp.float32), "ln1_b": jnp.zeros((HIDDEN,), jnp.float32),
            "Wi": nrm(next(keys), (HIDDEN, INTERMEDIATE)),
            "bi": jnp.zeros((INTERMEDIATE,), jnp.float32),
            "Wout": nrm(next(keys), (INTERMEDIATE, HIDDEN)),
            "bout": jnp.zeros((HIDDEN,), jnp.float32),
            "ln2_g": jnp.ones((HIDDEN,), jnp.float32), "ln2_b": jnp.zeros((HIDDEN,), jnp.float32),
        })
    return params


def prepare_inference_params(p):
    """Pack torch-like f32 params into kernel-ready operands (host-side, one time)."""
    scale = 1.0 / math.sqrt(HEAD_DIM)

    def pad128(v):
        v = jnp.asarray(v, jnp.float32).reshape(-1)
        return jnp.pad(v, (0, 128 - v.shape[0]))

    rows = [pad128(p["emb_ln_g"]), pad128(p["emb_ln_b"])]
    wqkv, wo, wi, wout = [], [], [], []
    for lp in p["layers"]:
        # fold 1/sqrt(head_dim) attention scale into the Q projection (mathematically exact)
        wqkv.append(jnp.concatenate([lp["Wq"] * scale, lp["Wk"], lp["Wv"]], axis=1))
        bqkv = jnp.concatenate([lp["bq"] * scale, lp["bk"], lp["bv"]])
        rows += [pad128(bqkv), pad128(lp["bo"]),
                 pad128(lp["ln1_g"]), pad128(lp["ln1_b"]),
                 pad128(lp["bi"]), pad128(lp["bout"]),
                 pad128(lp["ln2_g"]), pad128(lp["ln2_b"])]
        wo.append(lp["Wo"]); wi.append(lp["Wi"]); wout.append(lp["Wout"])
    rows.append(pad128(p["bc"]))
    assert len(rows) == _VEC_ROWS
    return {
        "word_emb": p["word_emb"],                          # [V, H] f32 (exact gather)
        "type_emb": p["type_emb"],                          # [2, H] f32
        "pos_emb": p["pos_emb"],                            # [MAX_POS, H] f32
        "vecs": jnp.stack(rows),                            # [19, 128] f32 packed biases/LN
        "Wqkv": jnp.stack(wqkv).astype(jnp.bfloat16),       # [L, H, 3H]
        "Wo": jnp.stack(wo).astype(jnp.bfloat16),           # [L, H, H]
        "Wi": jnp.stack(wi).astype(jnp.bfloat16),           # [L, H, I]
        "Wout": jnp.stack(wout).astype(jnp.bfloat16),       # [L, I, H]
        "Wc": p["Wc"].astype(jnp.bfloat16),                 # [H, V]
    }


# ---------------------------------- forward -------------------------------------
def bert_lm_forward(kp, input_ids, attention_mask, token_type_ids):
    B, S = input_ids.shape
    M = B * S

    # wrapper-side layout plumbing only (tiny XLA ops); all compute is in the kernel
    ids = input_ids.reshape(M, 1).astype(jnp.int32)
    tt = token_type_ids.reshape(M, 1).astype(jnp.int32)
    pos = jnp.tile(kp["pos_emb"][:S], (B, 1))                                   # [M, H]
    # HF-style extended attention mask: (1 - mask) * -1e9, per key position
    neg_mask = (1.0 - attention_mask.astype(jnp.float32)) * -1e9                # [B, S]

    probs = _bert_pallas(ids, tt, neg_mask, pos,
                         kp["word_emb"], kp["type_emb"], kp["vecs"],
                         kp["Wqkv"], kp["Wo"], kp["Wi"], kp["Wout"], kp["Wc"],
                         batch=B, seq=S)                                        # [M, V]
    return probs.reshape(B, S, VOCAB)


# ------------------------------------ main ---------------------------------------
if __name__ == "__main__":
    key = jax.random.PRNGKey(0)
    k_params, k_ids = jax.random.split(key)
    params = init_params(k_params)
    kparams = prepare_inference_params(params)

    B, S = 2, 8
    input_ids = jax.random.randint(k_ids, (B, S), 0, VOCAB, dtype=jnp.int32)
    token_type_ids = jnp.zeros((B, S), jnp.int32)
    attention_mask = jnp.ones((B, S), jnp.int32).at[1, 6:].set(0)   # pad last 2 of batch 1

    fwd = jax.jit(bert_lm_forward)
    out = fwd(kparams, input_ids, attention_mask, token_type_ids)
    jax.block_until_ready(out)

    assert out.shape == (B, S, VOCAB)
    # rows of the softmax output must sum to 1
    assert bool(jnp.allclose(out.sum(-1), 1.0, atol=1e-4))
    print("KERNEL_OK")
</pallas_src>

<mosaic_0001>
module attributes {stable_mosaic.version = 11 : i64} {
  func.func @_bert_forward_kernel(%arg0: i32, %arg1: memref<16x1xi32, #tpu.memory_space<vmem>>, %arg2: memref<16x1xi32, #tpu.memory_space<vmem>>, %arg3: memref<2x8xf32, #tpu.memory_space<vmem>>, %arg4: memref<16x32xf32, #tpu.memory_space<vmem>>, %arg5: memref<128x32xf32, #tpu.memory_space<vmem>>, %arg6: memref<2x32xf32, #tpu.memory_space<vmem>>, %arg7: memref<19x128xf32, #tpu.memory_space<vmem>>, %arg8: memref<2x32x96xbf16, #tpu.memory_space<vmem>>, %arg9: memref<2x32x32xbf16, #tpu.memory_space<vmem>>, %arg10: memref<2x32x64xbf16, #tpu.memory_space<vmem>>, %arg11: memref<2x64x32xbf16, #tpu.memory_space<vmem>>, %arg12: memref<32x128xbf16, #tpu.memory_space<vmem>>, %arg13: memref<16x128xf32, #tpu.memory_space<vmem>>) attributes {dimension_semantics = [#tpu.dimension_semantics<arbitrary>], iteration_bounds = array<i64: 1>, scalar_prefetch = 0 : i64, scratch_operands = 0 : i64, tpu.core_type = #tpu.core_type<tc>, window_params = [{pipeline_mode = #tpu.pipeline_mode<synchronous>, transform_indices = @transform_0, window_bounds = array<i64: 16, 1>}, {pipeline_mode = #tpu.pipeline_mode<synchronous>, transform_indices = @transform_1, window_bounds = array<i64: 16, 1>}, {pipeline_mode = #tpu.pipeline_mode<synchronous>, transform_indices = @transform_2, window_bounds = array<i64: 2, 8>}, {pipeline_mode = #tpu.pipeline_mode<synchronous>, transform_indices = @transform_3, window_bounds = array<i64: 16, 32>}, {pipeline_mode = #tpu.pipeline_mode<synchronous>, transform_indices = @transform_4, window_bounds = array<i64: 128, 32>}, {pipeline_mode = #tpu.pipeline_mode<synchronous>, transform_indices = @transform_5, window_bounds = array<i64: 2, 32>}, {pipeline_mode = #tpu.pipeline_mode<synchronous>, transform_indices = @transform_6, window_bounds = array<i64: 19, 128>}, {pipeline_mode = #tpu.pipeline_mode<synchronous>, transform_indices = @transform_7, window_bounds = array<i64: 2, 32, 96>}, {pipeline_mode = #tpu.pipeline_mode<synchronous>, transform_indices = @transform_8, window_bounds = array<i64: 2, 32, 32>}, {pipeline_mode = #tpu.pipeline_mode<synchronous>, transform_indices = @transform_9, window_bounds = array<i64: 2, 32, 64>}, {pipeline_mode = #tpu.pipeline_mode<synchronous>, transform_indices = @transform_10, window_bounds = array<i64: 2, 64, 32>}, {pipeline_mode = #tpu.pipeline_mode<synchronous>, transform_indices = @transform_11, window_bounds = array<i64: 32, 128>}, {pipeline_mode = #tpu.pipeline_mode<synchronous>, transform_indices = @transform_12, window_bounds = array<i64: 16, 128>}]} {
    %c0 = arith.constant 0 : index
    %c0_0 = arith.constant 0 : index
    %0 = vector.load %arg7[%c0, %c0_0] : memref<19x128xf32, #tpu.memory_space<vmem>>, vector<19x128xf32>
    %c0_1 = arith.constant 0 : index
    %c0_2 = arith.constant 0 : index
    %1 = vector.load %arg1[%c0_1, %c0_2] : memref<16x1xi32, #tpu.memory_space<vmem>>, vector<16x1xi32>
    %2 = tpu.iota {dimensions = array<i32: 1>} : vector<16x128xi32>
    %3 = vector.broadcast %1 : vector<16x1xi32> to vector<16x128xi32>
    %4 = arith.cmpi eq, %2, %3 : vector<16x128xi32>
    %5 = arith.extui %4 : vector<16x128xi1> to vector<16x128xi32>
    %6 = arith.sitofp %5 : vector<16x128xi32> to vector<16x128xf32>
    %c0_3 = arith.constant 0 : index
    %c0_4 = arith.constant 0 : index
    %7 = vector.load %arg5[%c0_3, %c0_4] : memref<128x32xf32, #tpu.memory_space<vmem>>, vector<128x32xf32>
    %cst = arith.constant dense<0.000000e+00> : vector<16x32xf32>
    %8 = tpu.matmul %6, %7, %cst {dimension_numbers = #tpu.dot_dimension_numbers<[1], [0], [0], [1], [0, 0, 1, 1], [], []>} : vector<16x128xf32>, vector<128x32xf32>, vector<16x32xf32> -> vector<16x32xf32>
    %c0_5 = arith.constant 0 : index
    %c0_6 = arith.constant 0 : index
    %9 = vector.load %arg2[%c0_5, %c0_6] : memref<16x1xi32, #tpu.memory_space<vmem>>, vector<16x1xi32>
    %10 = arith.sitofp %9 : vector<16x1xi32> to vector<16x1xf32>
    %c0_7 = arith.constant 0 : index
    %c0_8 = arith.constant 0 : index
    %11 = vector.load %arg6[%c0_7, %c0_8] : memref<2x32xf32, #tpu.memory_space<vmem>>, vector<1x32xf32>
    %cst_9 = arith.constant 1.000000e+00 : f32
    %12 = vector.broadcast %cst_9 : f32 to vector<16x1xf32>
    %13 = arith.subf %12, %10 : vector<16x1xf32>
    %14 = vector.broadcast %11 : vector<1x32xf32> to vector<16x32xf32>
    %15 = vector.broadcast %13 : vector<16x1xf32> to vector<16x32xf32>
    %16 = arith.mulf %14, %15 : vector<16x32xf32>
    %c1 = arith.constant 1 : index
    %c0_10 = arith.constant 0 : index
    %17 = vector.load %arg6[%c1, %c0_10] : memref<2x32xf32, #tpu.memory_space<vmem>>, vector<1x32xf32>
    %18 = vector.broadcast %17 : vector<1x32xf32> to vector<16x32xf32>
    %19 = vector.broadcast %10 : vector<16x1xf32> to vector<16x32xf32>
    %20 = arith.mulf %18, %19 : vector<16x32xf32>
    %21 = arith.addf %16, %20 : vector<16x32xf32>
    %22 = arith.addf %8, %21 : vector<16x32xf32>
    %c0_11 = arith.constant 0 : index
    %c0_12 = arith.constant 0 : index
    %23 = vector.load %arg4[%c0_11, %c0_12] : memref<16x32xf32, #tpu.memory_space<vmem>>, vector<16x32xf32>
    %24 = arith.addf %22, %23 : vector<16x32xf32>
    %25 = vector.extract_strided_slice %0 {offsets = [0, 0], sizes = [1, 32], strides = [1, 1]} : vector<19x128xf32> to vector<1x32xf32>
    %26 = vector.extract_strided_slice %0 {offsets = [1, 0], sizes = [1, 32], strides = [1, 1]} : vector<19x128xf32> to vector<1x32xf32>
    %cst_13 = arith.constant dense<0.000000e+00> : vector<16xf32>
    %27 = vector.multi_reduction <add>, %24, %cst_13 [1] : vector<16x32xf32> to vector<16xf32>
    %28 = vector.shape_cast %27 : vector<16xf32> to vector<16x1xf32>
    %cst_14 = arith.constant 3.200000e+01 : f32
    %29 = vector.broadcast %cst_14 : f32 to vector<16x1xf32>
    %30 = arith.divf %28, %29 : vector<16x1xf32>
    %31 = vector.broadcast %30 : vector<16x1xf32> to vector<16x32xf32>
    %32 = arith.subf %24, %31 : vector<16x32xf32>
    %33 = arith.mulf %32, %32 : vector<16x32xf32>
    %cst_15 = arith.constant dense<0.000000e+00> : vector<16xf32>
    %34 = vector.multi_reduction <add>, %33, %cst_15 [1] : vector<16x32xf32> to vector<16xf32>
    %35 = vector.shape_cast %34 : vector<16xf32> to vector<16x1xf32>
    %cst_16 = arith.constant 3.200000e+01 : f32
    %36 = vector.broadcast %cst_16 : f32 to vector<16x1xf32>
    %37 = arith.divf %35, %36 : vector<16x1xf32>
    %38 = vector.broadcast %30 : vector<16x1xf32> to vector<16x32xf32>
    %39 = arith.subf %24, %38 : vector<16x32xf32>
    %cst_17 = arith.constant 9.99999996E-13 : f32
    %40 = vector.broadcast %cst_17 : f32 to vector<16x1xf32>
    %41 = arith.addf %37, %40 : vector<16x1xf32>
    %42 = math.rsqrt %41 : vector<16x1xf32>
    %43 = vector.broadcast %42 : vector<16x1xf32> to vector<16x32xf32>
    %44 = arith.mulf %39, %43 : vector<16x32xf32>
    %45 = vector.broadcast %25 : vector<1x32xf32> to vector<16x32xf32>
    %46 = arith.mulf %44, %45 : vector<16x32xf32>
    %47 = vector.broadcast %26 : vector<1x32xf32> to vector<16x32xf32>
    %48 = arith.addf %46, %47 : vector<16x32xf32>
    %c0_18 = arith.constant 0 : index
    %c0_19 = arith.constant 0 : index
    %49 = vector.load %arg3[%c0_18, %c0_19] : memref<2x8xf32, #tpu.memory_space<vmem>>, vector<2x8xf32>
    %50 = vector.shape_cast %49 : vector<2x8xf32> to vector<2x1x8xf32>
    %51 = vector.shape_cast %50 : vector<2x1x8xf32> to vector<2x1x8xf32>
    %52 = vector.broadcast %51 : vector<2x1x8xf32> to vector<2x8x8xf32>
    %c0_20 = arith.constant 0 : index
    %c0_21 = arith.constant 0 : index
    %c0_22 = arith.constant 0 : index
    %53 = vector.load %arg8[%c0_20, %c0_21, %c0_22] : memref<2x32x96xbf16, #tpu.memory_space<vmem>>, vector<1x32x96xbf16>
    %54 = vector.shape_cast %53 : vector<1x32x96xbf16> to vector<32x96xbf16>
    %55 = arith.truncf %48 : vector<16x32xf32> to vector<16x32xbf16>
    %cst_23 = arith.constant dense<0.000000e+00> : vector<16x96xf32>
    %56 = tpu.matmul %55, %54, %cst_23 {dimension_numbers = #tpu.dot_dimension_numbers<[1], [0], [0], [1], [0, 0, 1, 1], [], []>} : vector<16x32xbf16>, vector<32x96xbf16>, vector<16x96xf32> -> vector<16x96xf32>
    %57 = vector.extract_strided_slice %0 {offsets = [2, 0], sizes = [1, 96], strides = [1, 1]} : vector<19x128xf32> to vector<1x96xf32>
    %58 = vector.broadcast %57 : vector<1x96xf32> to vector<16x96xf32>
    %59 = arith.addf %56, %58 : vector<16x96xf32>
    %60 = vector.shape_cast %59 : vector<16x96xf32> to vector<2x8x96xf32>
    %61 = vector.extract_strided_slice %60 {offsets = [0, 0, 0], sizes = [2, 8, 8], strides = [1, 1, 1]} : vector<2x8x96xf32> to vector<2x8x8xf32>
    %62 = arith.truncf %61 : vector<2x8x8xf32> to vector<2x8x8xbf16>
    %63 = vector.extract_strided_slice %60 {offsets = [0, 0, 32], sizes = [2, 8, 8], strides = [1, 1, 1]} : vector<2x8x96xf32> to vector<2x8x8xf32>
    %64 = arith.truncf %63 : vector<2x8x8xf32> to vector<2x8x8xbf16>
    %65 = vector.extract_strided_slice %60 {offsets = [0, 0, 64], sizes = [2, 8, 8], strides = [1, 1, 1]} : vector<2x8x96xf32> to vector<2x8x8xf32>
    %66 = arith.truncf %65 : vector<2x8x8xf32> to vector<2x8x8xbf16>
    "tpu.trace_start"() <{level = 10 : i32, message = "bqd,bkd->bqk"}> : () -> ()
    %cst_24 = arith.constant dense<0.000000e+00> : vector<2x8x8xf32>
    %67 = tpu.matmul %62, %64, %cst_24 {dimension_numbers = #tpu.dot_dimension_numbers<[2], [2], [1], [1], [0, 0, 0, 1, 1, 1], [0], [0]>} : vector<2x8x8xbf16>, vector<2x8x8xbf16>, vector<2x8x8xf32> -> vector<2x8x8xf32>
    "tpu.trace_stop"() : () -> ()
    %68 = arith.addf %67, %52 : vector<2x8x8xf32>
    %cst_25 = arith.constant dense<0xFF800000> : vector<2x8xf32>
    %69 = vector.multi_reduction <maximumf>, %68, %cst_25 [2] : vector<2x8x8xf32> to vector<2x8xf32>
    %70 = vector.shape_cast %69 : vector<2x8xf32> to vector<2x8x1xf32>
    %71 = vector.broadcast %70 : vector<2x8x1xf32> to vector<2x8x8xf32>
    %72 = arith.subf %68, %71 : vector<2x8x8xf32>
    %73 = math.exp %72 : vector<2x8x8xf32>
    %cst_26 = arith.constant dense<0.000000e+00> : vector<2x8xf32>
    %74 = vector.multi_reduction <add>, %73, %cst_26 [2] : vector<2x8x8xf32> to vector<2x8xf32>
    %75 = vector.shape_cast %74 : vector<2x8xf32> to vector<2x8x1xf32>
    %76 = vector.broadcast %75 : vector<2x8x1xf32> to vector<2x8x8xf32>
    %77 = arith.divf %73, %76 : vector<2x8x8xf32>
    %78 = arith.truncf %77 : vector<2x8x8xf32> to vector<2x8x8xbf16>
    "tpu.trace_start"() <{level = 10 : i32, message = "bqk,bkd->bqd"}> : () -> ()
    %cst_27 = arith.constant dense<0.000000e+00> : vector<2x8x8xf32>
    %79 = tpu.matmul %78, %66, %cst_27 {dimension_numbers = #tpu.dot_dimension_numbers<[2], [1], [1], [2], [0, 0, 0, 1, 1, 2], [0], [0]>} : vector<2x8x8xbf16>, vector<2x8x8xbf16>, vector<2x8x8xf32> -> vector<2x8x8xf32>
    "tpu.trace_stop"() : () -> ()
    %80 = vector.shape_cast %79 : vector<2x8x8xf32> to vector<16x8xf32>
    %81 = vector.extract_strided_slice %60 {offsets = [0, 0, 8], sizes = [2, 8, 8], strides = [1, 1, 1]} : vector<2x8x96xf32> to vector<2x8x8xf32>
    %82 = arith.truncf %81 : vector<2x8x8xf32> to vector<2x8x8xbf16>
    %83 = vector.extract_strided_slice %60 {offsets = [0, 0, 40], sizes = [2, 8, 8], strides = [1, 1, 1]} : vector<2x8x96xf32> to vector<2x8x8xf32>
    %84 = arith.truncf %83 : vector<2x8x8xf32> to vector<2x8x8xbf16>
    %85 = vector.extract_strided_slice %60 {offsets = [0, 0, 72], sizes = [2, 8, 8], strides = [1, 1, 1]} : vector<2x8x96xf32> to vector<2x8x8xf32>
    %86 = arith.truncf %85 : vector<2x8x8xf32> to vector<2x8x8xbf16>
    "tpu.trace_start"() <{level = 10 : i32, message = "bqd,bkd->bqk"}> : () -> ()
    %cst_28 = arith.constant dense<0.000000e+00> : vector<2x8x8xf32>
    %87 = tpu.matmul %82, %84, %cst_28 {dimension_numbers = #tpu.dot_dimension_numbers<[2], [2], [1], [1], [0, 0, 0, 1, 1, 1], [0], [0]>} : vector<2x8x8xbf16>, vector<2x8x8xbf16>, vector<2x8x8xf32> -> vector<2x8x8xf32>
    "tpu.trace_stop"() : () -> ()
    %88 = arith.addf %87, %52 : vector<2x8x8xf32>
    %cst_29 = arith.constant dense<0xFF800000> : vector<2x8xf32>
    %89 = vector.multi_reduction <maximumf>, %88, %cst_29 [2] : vector<2x8x8xf32> to vector<2x8xf32>
    %90 = vector.shape_cast %89 : vector<2x8xf32> to vector<2x8x1xf32>
    %91 = vector.broadcast %90 : vector<2x8x1xf32> to vector<2x8x8xf32>
    %92 = arith.subf %88, %91 : vector<2x8x8xf32>
    %93 = math.exp %92 : vector<2x8x8xf32>
    %cst_30 = arith.constant dense<0.000000e+00> : vector<2x8xf32>
    %94 = vector.multi_reduction <add>, %93, %cst_30 [2] : vector<2x8x8xf32> to vector<2x8xf32>
    %95 = vector.shape_cast %94 : vector<2x8xf32> to vector<2x8x1xf32>
    %96 = vector.broadcast %95 : vector<2x8x1xf32> to vector<2x8x8xf32>
    %97 = arith.divf %93, %96 : vector<2x8x8xf32>
    %98 = arith.truncf %97 : vector<2x8x8xf32> to vector<2x8x8xbf16>
    "tpu.trace_start"() <{level = 10 : i32, message = "bqk,bkd->bqd"}> : () -> ()
    %cst_31 = arith.constant dense<0.000000e+00> : vector<2x8x8xf32>
    %99 = tpu.matmul %98, %86, %cst_31 {dimension_numbers = #tpu.dot_dimension_numbers<[2], [1], [1], [2], [0, 0, 0, 1, 1, 2], [0], [0]>} : vector<2x8x8xbf16>, vector<2x8x8xbf16>, vector<2x8x8xf32> -> vector<2x8x8xf32>
    "tpu.trace_stop"() : () -> ()
    %100 = vector.shape_cast %99 : vector<2x8x8xf32> to vector<16x8xf32>
    %101 = vector.extract_strided_slice %60 {offsets = [0, 0, 16], sizes = [2, 8, 8], strides = [1, 1, 1]} : vector<2x8x96xf32> to vector<2x8x8xf32>
    %102 = arith.truncf %101 : vector<2x8x8xf32> to vector<2x8x8xbf16>
    %103 = vector.extract_strided_slice %60 {offsets = [0, 0, 48], sizes = [2, 8, 8], strides = [1, 1, 1]} : vector<2x8x96xf32> to vector<2x8x8xf32>
    %104 = arith.truncf %103 : vector<2x8x8xf32> to vector<2x8x8xbf16>
    %105 = vector.extract_strided_slice %60 {offsets = [0, 0, 80], sizes = [2, 8, 8], strides = [1, 1, 1]} : vector<2x8x96xf32> to vector<2x8x8xf32>
    %106 = arith.truncf %105 : vector<2x8x8xf32> to vector<2x8x8xbf16>
    "tpu.trace_start"() <{level = 10 : i32, message = "bqd,bkd->bqk"}> : () -> ()
    %cst_32 = arith.constant dense<0.000000e+00> : vector<2x8x8xf32>
    %107 = tpu.matmul %102, %104, %cst_32 {dimension_numbers = #tpu.dot_dimension_numbers<[2], [2], [1], [1], [0, 0, 0, 1, 1, 1], [0], [0]>} : vector<2x8x8xbf16>, vector<2x8x8xbf16>, vector<2x8x8xf32> -> vector<2x8x8xf32>
    "tpu.trace_stop"() : () -> ()
    %108 = arith.addf %107, %52 : vector<2x8x8xf32>
    %cst_33 = arith.constant dense<0xFF800000> : vector<2x8xf32>
    %109 = vector.multi_reduction <maximumf>, %108, %cst_33 [2] : vector<2x8x8xf32> to vector<2x8xf32>
    %110 = vector.shape_cast %109 : vector<2x8xf32> to vector<2x8x1xf32>
    %111 = vector.broadcast %110 : vector<2x8x1xf32> to vector<2x8x8xf32>
    %112 = arith.subf %108, %111 : vector<2x8x8xf32>
    %113 = math.exp %112 : vector<2x8x8xf32>
    %cst_34 = arith.constant dense<0.000000e+00> : vector<2x8xf32>
    %114 = vector.multi_reduction <add>, %113, %cst_34 [2] : vector<2x8x8xf32> to vector<2x8xf32>
    %115 = vector.shape_cast %114 : vector<2x8xf32> to vector<2x8x1xf32>
    %116 = vector.broadcast %115 : vector<2x8x1xf32> to vector<2x8x8xf32>
    %117 = arith.divf %113, %116 : vector<2x8x8xf32>
    %118 = arith.truncf %117 : vector<2x8x8xf32> to vector<2x8x8xbf16>
    "tpu.trace_start"() <{level = 10 : i32, message = "bqk,bkd->bqd"}> : () -> ()
    %cst_35 = arith.constant dense<0.000000e+00> : vector<2x8x8xf32>
    %119 = tpu.matmul %118, %106, %cst_35 {dimension_numbers = #tpu.dot_dimension_numbers<[2], [1], [1], [2], [0, 0, 0, 1, 1, 2], [0], [0]>} : vector<2x8x8xbf16>, vector<2x8x8xbf16>, vector<2x8x8xf32> -> vector<2x8x8xf32>
    "tpu.trace_stop"() : () -> ()
    %120 = vector.shape_cast %119 : vector<2x8x8xf32> to vector<16x8xf32>
    %121 = vector.extract_strided_slice %60 {offsets = [0, 0, 24], sizes = [2, 8, 8], strides = [1, 1, 1]} : vector<2x8x96xf32> to vector<2x8x8xf32>
    %122 = arith.truncf %121 : vector<2x8x8xf32> to vector<2x8x8xbf16>
    %123 = vector.extract_strided_slice %60 {offsets = [0, 0, 56], sizes = [2, 8, 8], strides = [1, 1, 1]} : vector<2x8x96xf32> to vector<2x8x8xf32>
    %124 = arith.truncf %123 : vector<2x8x8xf32> to vector<2x8x8xbf16>
    %125 = vector.extract_strided_slice %60 {offsets = [0, 0, 88], sizes = [2, 8, 8], strides = [1, 1, 1]} : vector<2x8x96xf32> to vector<2x8x8xf32>
    %126 = arith.truncf %125 : vector<2x8x8xf32> to vector<2x8x8xbf16>
    "tpu.trace_start"() <{level = 10 : i32, message = "bqd,bkd->bqk"}> : () -> ()
    %cst_36 = arith.constant dense<0.000000e+00> : vector<2x8x8xf32>
    %127 = tpu.matmul %122, %124, %cst_36 {dimension_numbers = #tpu.dot_dimension_numbers<[2], [2], [1], [1], [0, 0, 0, 1, 1, 1], [0], [0]>} : vector<2x8x8xbf16>, vector<2x8x8xbf16>, vector<2x8x8xf32> -> vector<2x8x8xf32>
    "tpu.trace_stop"() : () -> ()
    %128 = arith.addf %127, %52 : vector<2x8x8xf32>
    %cst_37 = arith.constant dense<0xFF800000> : vector<2x8xf32>
    %129 = vector.multi_reduction <maximumf>, %128, %cst_37 [2] : vector<2x8x8xf32> to vector<2x8xf32>
    %130 = vector.shape_cast %129 : vector<2x8xf32> to vector<2x8x1xf32>
    %131 = vector.broadcast %130 : vector<2x8x1xf32> to vector<2x8x8xf32>
    %132 = arith.subf %128, %131 : vector<2x8x8xf32>
    %133 = math.exp %132 : vector<2x8x8xf32>
    %cst_38 = arith.constant dense<0.000000e+00> : vector<2x8xf32>
    %134 = vector.multi_reduction <add>, %133, %cst_38 [2] : vector<2x8x8xf32> to vector<2x8xf32>
    %135 = vector.shape_cast %134 : vector<2x8xf32> to vector<2x8x1xf32>
    %136 = vector.broadcast %135 : vector<2x8x1xf32> to vector<2x8x8xf32>
    %137 = arith.divf %133, %136 : vector<2x8x8xf32>
    %138 = arith.truncf %137 : vector<2x8x8xf32> to vector<2x8x8xbf16>
    "tpu.trace_start"() <{level = 10 : i32, message = "bqk,bkd->bqd"}> : () -> ()
    %cst_39 = arith.constant dense<0.000000e+00> : vector<2x8x8xf32>
    %139 = tpu.matmul %138, %126, %cst_39 {dimension_numbers = #tpu.dot_dimension_numbers<[2], [1], [1], [2], [0, 0, 0, 1, 1, 2], [0], [0]>} : vector<2x8x8xbf16>, vector<2x8x8xbf16>, vector<2x8x8xf32> -> vector<2x8x8xf32>
    "tpu.trace_stop"() : () -> ()
    %140 = vector.shape_cast %139 : vector<2x8x8xf32> to vector<16x8xf32>
    %141 = tpu.concatenate %80, %100, %120, %140 in 1 : vector<16x8xf32>, vector<16x8xf32>, vector<16x8xf32>, vector<16x8xf32> -> vector<16x32xf32>
    %c0_40 = arith.constant 0 : index
    %c0_41 = arith.constant 0 : index
    %c0_42 = arith.constant 0 : index
    %142 = vector.load %arg9[%c0_40, %c0_41, %c0_42] : memref<2x32x32xbf16, #tpu.memory_space<vmem>>, vector<1x32x32xbf16>
    %143 = vector.shape_cast %142 : vector<1x32x32xbf16> to vector<32x32xbf16>
    %144 = arith.truncf %141 : vector<16x32xf32> to vector<16x32xbf16>
    %cst_43 = arith.constant dense<0.000000e+00> : vector<16x32xf32>
    %145 = tpu.matmul %144, %143, %cst_43 {dimension_numbers = #tpu.dot_dimension_numbers<[1], [0], [0], [1], [0, 0, 1, 1], [], []>} : vector<16x32xbf16>, vector<32x32xbf16>, vector<16x32xf32> -> vector<16x32xf32>
    %146 = vector.extract_strided_slice %0 {offsets = [3, 0], sizes = [1, 32], strides = [1, 1]} : vector<19x128xf32> to vector<1x32xf32>
    %147 = vector.broadcast %146 : vector<1x32xf32> to vector<16x32xf32>
    %148 = arith.addf %145, %147 : vector<16x32xf32>
    %149 = arith.addf %48, %148 : vector<16x32xf32>
    %150 = vector.extract_strided_slice %0 {offsets = [4, 0], sizes = [1, 32], strides = [1, 1]} : vector<19x128xf32> to vector<1x32xf32>
    %151 = vector.extract_strided_slice %0 {offsets = [5, 0], sizes = [1, 32], strides = [1, 1]} : vector<19x128xf32> to vector<1x32xf32>
    %cst_44 = arith.constant dense<0.000000e+00> : vector<16xf32>
    %152 = vector.multi_reduction <add>, %149, %cst_44 [1] : vector<16x32xf32> to vector<16xf32>
    %153 = vector.shape_cast %152 : vector<16xf32> to vector<16x1xf32>
    %cst_45 = arith.constant 3.200000e+01 : f32
    %154 = vector.broadcast %cst_45 : f32 to vector<16x1xf32>
    %155 = arith.divf %153, %154 : vector<16x1xf32>
    %156 = vector.broadcast %155 : vector<16x1xf32> to vector<16x32xf32>
    %157 = arith.subf %149, %156 : vector<16x32xf32>
    %158 = arith.mulf %157, %157 : vector<16x32xf32>
    %cst_46 = arith.constant dense<0.000000e+00> : vector<16xf32>
    %159 = vector.multi_reduction <add>, %158, %cst_46 [1] : vector<16x32xf32> to vector<16xf32>
    %160 = vector.shape_cast %159 : vector<16xf32> to vector<16x1xf32>
    %cst_47 = arith.constant 3.200000e+01 : f32
    %161 = vector.broadcast %cst_47 : f32 to vector<16x1xf32>
    %162 = arith.divf %160, %161 : vector<16x1xf32>
    %163 = vector.broadcast %155 : vector<16x1xf32> to vector<16x32xf32>
    %164 = arith.subf %149, %163 : vector<16x32xf32>
    %cst_48 = arith.constant 9.99999996E-13 : f32
    %165 = vector.broadcast %cst_48 : f32 to vector<16x1xf32>
    %166 = arith.addf %162, %165 : vector<16x1xf32>
    %167 = math.rsqrt %166 : vector<16x1xf32>
    %168 = vector.broadcast %167 : vector<16x1xf32> to vector<16x32xf32>
    %169 = arith.mulf %164, %168 : vector<16x32xf32>
    %170 = vector.broadcast %150 : vector<1x32xf32> to vector<16x32xf32>
    %171 = arith.mulf %169, %170 : vector<16x32xf32>
    %172 = vector.broadcast %151 : vector<1x32xf32> to vector<16x32xf32>
    %173 = arith.addf %171, %172 : vector<16x32xf32>
    %c0_49 = arith.constant 0 : index
    %c0_50 = arith.constant 0 : index
    %c0_51 = arith.constant 0 : index
    %174 = vector.load %arg10[%c0_49, %c0_50, %c0_51] : memref<2x32x64xbf16, #tpu.memory_space<vmem>>, vector<1x32x64xbf16>
    %175 = vector.shape_cast %174 : vector<1x32x64xbf16> to vector<32x64xbf16>
    %176 = arith.truncf %173 : vector<16x32xf32> to vector<16x32xbf16>
    %cst_52 = arith.constant dense<0.000000e+00> : vector<16x64xf32>
    %177 = tpu.matmul %176, %175, %cst_52 {dimension_numbers = #tpu.dot_dimension_numbers<[1], [0], [0], [1], [0, 0, 1, 1], [], []>} : vector<16x32xbf16>, vector<32x64xbf16>, vector<16x64xf32> -> vector<16x64xf32>
    %178 = vector.extract_strided_slice %0 {offsets = [6, 0], sizes = [1, 64], strides = [1, 1]} : vector<19x128xf32> to vector<1x64xf32>
    %179 = vector.broadcast %178 : vector<1x64xf32> to vector<16x64xf32>
    %180 = arith.addf %177, %179 : vector<16x64xf32>
    %181 = arith.mulf %180, %180 : vector<16x64xf32>
    %182 = arith.mulf %180, %181 : vector<16x64xf32>
    %cst_53 = arith.constant 4.471500e-02 : f32
    %183 = vector.broadcast %cst_53 : f32 to vector<16x64xf32>
    %184 = arith.mulf %183, %182 : vector<16x64xf32>
    %185 = arith.addf %180, %184 : vector<16x64xf32>
    %cst_54 = arith.constant 0.797884583 : f32
    %186 = vector.broadcast %cst_54 : f32 to vector<16x64xf32>
    %187 = arith.mulf %186, %185 : vector<16x64xf32>
    %188 = math.tanh %187 : vector<16x64xf32>
    %cst_55 = arith.constant 1.000000e+00 : f32
    %189 = vector.broadcast %cst_55 : f32 to vector<16x64xf32>
    %190 = arith.addf %189, %188 : vector<16x64xf32>
    %cst_56 = arith.constant 5.000000e-01 : f32
    %191 = vector.broadcast %cst_56 : f32 to vector<16x64xf32>
    %192 = arith.mulf %191, %190 : vector<16x64xf32>
    %193 = arith.mulf %180, %192 : vector<16x64xf32>
    %c0_57 = arith.constant 0 : index
    %c0_58 = arith.constant 0 : index
    %c0_59 = arith.constant 0 : index
    %194 = vector.load %arg11[%c0_57, %c0_58, %c0_59] : memref<2x64x32xbf16, #tpu.memory_space<vmem>>, vector<1x64x32xbf16>
    %195 = vector.shape_cast %194 : vector<1x64x32xbf16> to vector<64x32xbf16>
    %196 = arith.truncf %193 : vector<16x64xf32> to vector<16x64xbf16>
    %cst_60 = arith.constant dense<0.000000e+00> : vector<16x32xf32>
    %197 = tpu.matmul %196, %195, %cst_60 {dimension_numbers = #tpu.dot_dimension_numbers<[1], [0], [0], [1], [0, 0, 1, 1], [], []>} : vector<16x64xbf16>, vector<64x32xbf16>, vector<16x32xf32> -> vector<16x32xf32>
    %198 = vector.extract_strided_slice %0 {offsets = [7, 0], sizes = [1, 32], strides = [1, 1]} : vector<19x128xf32> to vector<1x32xf32>
    %199 = vector.broadcast %198 : vector<1x32xf32> to vector<16x32xf32>
    %200 = arith.addf %197, %199 : vector<16x32xf32>
    %201 = arith.addf %173, %200 : vector<16x32xf32>
    %202 = vector.extract_strided_slice %0 {offsets = [8, 0], sizes = [1, 32], strides = [1, 1]} : vector<19x128xf32> to vector<1x32xf32>
    %203 = vector.extract_strided_slice %0 {offsets = [9, 0], sizes = [1, 32], strides = [1, 1]} : vector<19x128xf32> to vector<1x32xf32>
    %cst_61 = arith.constant dense<0.000000e+00> : vector<16xf32>
    %204 = vector.multi_reduction <add>, %201, %cst_61 [1] : vector<16x32xf32> to vector<16xf32>
    %205 = vector.shape_cast %204 : vector<16xf32> to vector<16x1xf32>
    %cst_62 = arith.constant 3.200000e+01 : f32
    %206 = vector.broadcast %cst_62 : f32 to vector<16x1xf32>
    %207 = arith.divf %205, %206 : vector<16x1xf32>
    %208 = vector.broadcast %207 : vector<16x1xf32> to vector<16x32xf32>
    %209 = arith.subf %201, %208 : vector<16x32xf32>
    %210 = arith.mulf %209, %209 : vector<16x32xf32>
    %cst_63 = arith.constant dense<0.000000e+00> : vector<16xf32>
    %211 = vector.multi_reduction <add>, %210, %cst_63 [1] : vector<16x32xf32> to vector<16xf32>
    %212 = vector.shape_cast %211 : vector<16xf32> to vector<16x1xf32>
    %cst_64 = arith.constant 3.200000e+01 : f32
    %213 = vector.broadcast %cst_64 : f32 to vector<16x1xf32>
    %214 = arith.divf %212, %213 : vector<16x1xf32>
    %215 = vector.broadcast %207 : vector<16x1xf32> to vector<16x32xf32>
    %216 = arith.subf %201, %215 : vector<16x32xf32>
    %cst_65 = arith.constant 9.99999996E-13 : f32
    %217 = vector.broadcast %cst_65 : f32 to vector<16x1xf32>
    %218 = arith.addf %214, %217 : vector<16x1xf32>
    %219 = math.rsqrt %218 : vector<16x1xf32>
    %220 = vector.broadcast %219 : vector<16x1xf32> to vector<16x32xf32>
    %221 = arith.mulf %216, %220 : vector<16x32xf32>
    %222 = vector.broadcast %202 : vector<1x32xf32> to vector<16x32xf32>
    %223 = arith.mulf %221, %222 : vector<16x32xf32>
    %224 = vector.broadcast %203 : vector<1x32xf32> to vector<16x32xf32>
    %225 = arith.addf %223, %224 : vector<16x32xf32>
    %c1_66 = arith.constant 1 : index
    %c0_67 = arith.constant 0 : index
    %c0_68 = arith.constant 0 : index
    %226 = vector.load %arg8[%c1_66, %c0_67, %c0_68] : memref<2x32x96xbf16, #tpu.memory_space<vmem>>, vector<1x32x96xbf16>
    %227 = vector.shape_cast %226 : vector<1x32x96xbf16> to vector<32x96xbf16>
    %228 = arith.truncf %225 : vector<16x32xf32> to vector<16x32xbf16>
    %cst_69 = arith.constant dense<0.000000e+00> : vector<16x96xf32>
    %229 = tpu.matmul %228, %227, %cst_69 {dimension_numbers = #tpu.dot_dimension_numbers<[1], [0], [0], [1], [0, 0, 1, 1], [], []>} : vector<16x32xbf16>, vector<32x96xbf16>, vector<16x96xf32> -> vector<16x96xf32>
    %230 = vector.extract_strided_slice %0 {offsets = [10, 0], sizes = [1, 96], strides = [1, 1]} : vector<19x128xf32> to vector<1x96xf32>
    %231 = vector.broadcast %230 : vector<1x96xf32> to vector<16x96xf32>
    %232 = arith.addf %229, %231 : vector<16x96xf32>
    %233 = vector.shape_cast %232 : vector<16x96xf32> to vector<2x8x96xf32>
    %234 = vector.extract_strided_slice %233 {offsets = [0, 0, 0], sizes = [2, 8, 8], strides = [1, 1, 1]} : vector<2x8x96xf32> to vector<2x8x8xf32>
    %235 = arith.truncf %234 : vector<2x8x8xf32> to vector<2x8x8xbf16>
    %236 = vector.extract_strided_slice %233 {offsets = [0, 0, 32], sizes = [2, 8, 8], strides = [1, 1, 1]} : vector<2x8x96xf32> to vector<2x8x8xf32>
    %237 = arith.truncf %236 : vector<2x8x8xf32> to vector<2x8x8xbf16>
    %238 = vector.extract_strided_slice %233 {offsets = [0, 0, 64], sizes = [2, 8, 8], strides = [1, 1, 1]} : vector<2x8x96xf32> to vector<2x8x8xf32>
    %239 = arith.truncf %238 : vector<2x8x8xf32> to vector<2x8x8xbf16>
    "tpu.trace_start"() <{level = 10 : i32, message = "bqd,bkd->bqk"}> : () -> ()
    %cst_70 = arith.constant dense<0.000000e+00> : vector<2x8x8xf32>
    %240 = tpu.matmul %235, %237, %cst_70 {dimension_numbers = #tpu.dot_dimension_numbers<[2], [2], [1], [1], [0, 0, 0, 1, 1, 1], [0], [0]>} : vector<2x8x8xbf16>, vector<2x8x8xbf16>, vector<2x8x8xf32> -> vector<2x8x8xf32>
    "tpu.trace_stop"() : () -> ()
    %241 = arith.addf %240, %52 : vector<2x8x8xf32>
    %cst_71 = arith.constant dense<0xFF800000> : vector<2x8xf32>
    %242 = vector.multi_reduction <maximumf>, %241, %cst_71 [2] : vector<2x8x8xf32> to vector<2x8xf32>
    %243 = vector.shape_cast %242 : vector<2x8xf32> to vector<2x8x1xf32>
    %244 = vector.broadcast %243 : vector<2x8x1xf32> to vector<2x8x8xf32>
    %245 = arith.subf %241, %244 : vector<2x8x8xf32>
    %246 = math.exp %245 : vector<2x8x8xf32>
    %cst_72 = arith.constant dense<0.000000e+00> : vector<2x8xf32>
    %247 = vector.multi_reduction <add>, %246, %cst_72 [2] : vector<2x8x8xf32> to vector<2x8xf32>
    %248 = vector.shape_cast %247 : vector<2x8xf32> to vector<2x8x1xf32>
    %249 = vector.broadcast %248 : vector<2x8x1xf32> to vector<2x8x8xf32>
    %250 = arith.divf %246, %249 : vector<2x8x8xf32>
    %251 = arith.truncf %250 : vector<2x8x8xf32> to vector<2x8x8xbf16>
    "tpu.trace_start"() <{level = 10 : i32, message = "bqk,bkd->bqd"}> : () -> ()
    %cst_73 = arith.constant dense<0.000000e+00> : vector<2x8x8xf32>
    %252 = tpu.matmul %251, %239, %cst_73 {dimension_numbers = #tpu.dot_dimension_numbers<[2], [1], [1], [2], [0, 0, 0, 1, 1, 2], [0], [0]>} : vector<2x8x8xbf16>, vector<2x8x8xbf16>, vector<2x8x8xf32> -> vector<2x8x8xf32>
    "tpu.trace_stop"() : () -> ()
    %253 = vector.shape_cast %252 : vector<2x8x8xf32> to vector<16x8xf32>
    %254 = vector.extract_strided_slice %233 {offsets = [0, 0, 8], sizes = [2, 8, 8], strides = [1, 1, 1]} : vector<2x8x96xf32> to vector<2x8x8xf32>
    %255 = arith.truncf %254 : vector<2x8x8xf32> to vector<2x8x8xbf16>
    %256 = vector.extract_strided_slice %233 {offsets = [0, 0, 40], sizes = [2, 8, 8], strides = [1, 1, 1]} : vector<2x8x96xf32> to vector<2x8x8xf32>
    %257 = arith.truncf %256 : vector<2x8x8xf32> to vector<2x8x8xbf16>
    %258 = vector.extract_strided_slice %233 {offsets = [0, 0, 72], sizes = [2, 8, 8], strides = [1, 1, 1]} : vector<2x8x96xf32> to vector<2x8x8xf32>
    %259 = arith.truncf %258 : vector<2x8x8xf32> to vector<2x8x8xbf16>
    "tpu.trace_start"() <{level = 10 : i32, message = "bqd,bkd->bqk"}> : () -> ()
    %cst_74 = arith.constant dense<0.000000e+00> : vector<2x8x8xf32>
    %260 = tpu.matmul %255, %257, %cst_74 {dimension_numbers = #tpu.dot_dimension_numbers<[2], [2], [1], [1], [0, 0, 0, 1, 1, 1], [0], [0]>} : vector<2x8x8xbf16>, vector<2x8x8xbf16>, vector<2x8x8xf32> -> vector<2x8x8xf32>
    "tpu.trace_stop"() : () -> ()
    %261 = arith.addf %260, %52 : vector<2x8x8xf32>
    %cst_75 = arith.constant dense<0xFF800000> : vector<2x8xf32>
    %262 = vector.multi_reduction <maximumf>, %261, %cst_75 [2] : vector<2x8x8xf32> to vector<2x8xf32>
    %263 = vector.shape_cast %262 : vector<2x8xf32> to vector<2x8x1xf32>
    %264 = vector.broadcast %263 : vector<2x8x1xf32> to vector<2x8x8xf32>
    %265 = arith.subf %261, %264 : vector<2x8x8xf32>
    %266 = math.exp %265 : vector<2x8x8xf32>
    %cst_76 = arith.constant dense<0.000000e+00> : vector<2x8xf32>
    %267 = vector.multi_reduction <add>, %266, %cst_76 [2] : vector<2x8x8xf32> to vector<2x8xf32>
    %268 = vector.shape_cast %267 : vector<2x8xf32> to vector<2x8x1xf32>
    %269 = vector.broadcast %268 : vector<2x8x1xf32> to vector<2x8x8xf32>
    %270 = arith.divf %266, %269 : vector<2x8x8xf32>
    %271 = arith.truncf %270 : vector<2x8x8xf32> to vector<2x8x8xbf16>
    "tpu.trace_start"() <{level = 10 : i32, message = "bqk,bkd->bqd"}> : () -> ()
    %cst_77 = arith.constant dense<0.000000e+00> : vector<2x8x8xf32>
    %272 = tpu.matmul %271, %259, %cst_77 {dimension_numbers = #tpu.dot_dimension_numbers<[2], [1], [1], [2], [0, 0, 0, 1, 1, 2], [0], [0]>} : vector<2x8x8xbf16>, vector<2x8x8xbf16>, vector<2x8x8xf32> -> vector<2x8x8xf32>
    "tpu.trace_stop"() : () -> ()
    %273 = vector.shape_cast %272 : vector<2x8x8xf32> to vector<16x8xf32>
    %274 = vector.extract_strided_slice %233 {offsets = [0, 0, 16], sizes = [2, 8, 8], strides = [1, 1, 1]} : vector<2x8x96xf32> to vector<2x8x8xf32>
    %275 = arith.truncf %274 : vector<2x8x8xf32> to vector<2x8x8xbf16>
    %276 = vector.extract_strided_slice %233 {offsets = [0, 0, 48], sizes = [2, 8, 8], strides = [1, 1, 1]} : vector<2x8x96xf32> to vector<2x8x8xf32>
    %277 = arith.truncf %276 : vector<2x8x8xf32> to vector<2x8x8xbf16>
    %278 = vector.extract_strided_slice %233 {offsets = [0, 0, 80], sizes = [2, 8, 8], strides = [1, 1, 1]} : vector<2x8x96xf32> to vector<2x8x8xf32>
    %279 = arith.truncf %278 : vector<2x8x8xf32> to vector<2x8x8xbf16>
    "tpu.trace_start"() <{level = 10 : i32, message = "bqd,bkd->bqk"}> : () -> ()
    %cst_78 = arith.constant dense<0.000000e+00> : vector<2x8x8xf32>
    %280 = tpu.matmul %275, %277, %cst_78 {dimension_numbers = #tpu.dot_dimension_numbers<[2], [2], [1], [1], [0, 0, 0, 1, 1, 1], [0], [0]>} : vector<2x8x8xbf16>, vector<2x8x8xbf16>, vector<2x8x8xf32> -> vector<2x8x8xf32>
    "tpu.trace_stop"() : () -> ()
    %281 = arith.addf %280, %52 : vector<2x8x8xf32>
    %cst_79 = arith.constant dense<0xFF800000> : vector<2x8xf32>
    %282 = vector.multi_reduction <maximumf>, %281, %cst_79 [2] : vector<2x8x8xf32> to vector<2x8xf32>
    %283 = vector.shape_cast %282 : vector<2x8xf32> to vector<2x8x1xf32>
    %284 = vector.broadcast %283 : vector<2x8x1xf32> to vector<2x8x8xf32>
    %285 = arith.subf %281, %284 : vector<2x8x8xf32>
    %286 = math.exp %285 : vector<2x8x8xf32>
    %cst_80 = arith.constant dense<0.000000e+00> : vector<2x8xf32>
    %287 = vector.multi_reduction <add>, %286, %cst_80 [2] : vector<2x8x8xf32> to vector<2x8xf32>
    %288 = vector.shape_cast %287 : vector<2x8xf32> to vector<2x8x1xf32>
    %289 = vector.broadcast %288 : vector<2x8x1xf32> to vector<2x8x8xf32>
    %290 = arith.divf %286, %289 : vector<2x8x8xf32>
    %291 = arith.truncf %290 : vector<2x8x8xf32> to vector<2x8x8xbf16>
    "tpu.trace_start"() <{level = 10 : i32, message = "bqk,bkd->bqd"}> : () -> ()
    %cst_81 = arith.constant dense<0.000000e+00> : vector<2x8x8xf32>
    %292 = tpu.matmul %291, %279, %cst_81 {dimension_numbers = #tpu.dot_dimension_numbers<[2], [1], [1], [2], [0, 0, 0, 1, 1, 2], [0], [0]>} : vector<2x8x8xbf16>, vector<2x8x8xbf16>, vector<2x8x8xf32> -> vector<2x8x8xf32>
    "tpu.trace_stop"() : () -> ()
    %293 = vector.shape_cast %292 : vector<2x8x8xf32> to vector<16x8xf32>
    %294 = vector.extract_strided_slice %233 {offsets = [0, 0, 24], sizes = [2, 8, 8], strides = [1, 1, 1]} : vector<2x8x96xf32> to vector<2x8x8xf32>
    %295 = arith.truncf %294 : vector<2x8x8xf32> to vector<2x8x8xbf16>
    %296 = vector.extract_strided_slice %233 {offsets = [0, 0, 56], sizes = [2, 8, 8], strides = [1, 1, 1]} : vector<2x8x96xf32> to vector<2x8x8xf32>
    %297 = arith.truncf %296 : vector<2x8x8xf32> to vector<2x8x8xbf16>
    %298 = vector.extract_strided_slice %233 {offsets = [0, 0, 88], sizes = [2, 8, 8], strides = [1, 1, 1]} : vector<2x8x96xf32> to vector<2x8x8xf32>
    %299 = arith.truncf %298 : vector<2x8x8xf32> to vector<2x8x8xbf16>
    "tpu.trace_start"() <{level = 10 : i32, message = "bqd,bkd->bqk"}> : () -> ()
    %cst_82 = arith.constant dense<0.000000e+00> : vector<2x8x8xf32>
    %300 = tpu.matmul %295, %297, %cst_82 {dimension_numbers = #tpu.dot_dimension_numbers<[2], [2], [1], [1], [0, 0, 0, 1, 1, 1], [0], [0]>} : vector<2x8x8xbf16>, vector<2x8x8xbf16>, vector<2x8x8xf32> -> vector<2x8x8xf32>
    "tpu.trace_stop"() : () -> ()
    %301 = arith.addf %300, %52 : vector<2x8x8xf32>
    %cst_83 = arith.constant dense<0xFF800000> : vector<2x8xf32>
    %302 = vector.multi_reduction <maximumf>, %301, %cst_83 [2] : vector<2x8x8xf32> to vector<2x8xf32>
    %303 = vector.shape_cast %302 : vector<2x8xf32> to vector<2x8x1xf32>
    %304 = vector.broadcast %303 : vector<2x8x1xf32> to vector<2x8x8xf32>
    %305 = arith.subf %301, %304 : vector<2x8x8xf32>
    %306 = math.exp %305 : vector<2x8x8xf32>
    %cst_84 = arith.constant dense<0.000000e+00> : vector<2x8xf32>
    %307 = vector.multi_reduction <add>, %306, %cst_84 [2] : vector<2x8x8xf32> to vector<2x8xf32>
    %308 = vector.shape_cast %307 : vector<2x8xf32> to vector<2x8x1xf32>
    %309 = vector.broadcast %308 : vector<2x8x1xf32> to vector<2x8x8xf32>
    %310 = arith.divf %306, %309 : vector<2x8x8xf32>
    %311 = arith.truncf %310 : vector<2x8x8xf32> to vector<2x8x8xbf16>
    "tpu.trace_start"() <{level = 10 : i32, message = "bqk,bkd->bqd"}> : () -> ()
    %cst_85 = arith.constant dense<0.000000e+00> : vector<2x8x8xf32>
    %312 = tpu.matmul %311, %299, %cst_85 {dimension_numbers = #tpu.dot_dimension_numbers<[2], [1], [1], [2], [0, 0, 0, 1, 1, 2], [0], [0]>} : vector<2x8x8xbf16>, vector<2x8x8xbf16>, vector<2x8x8xf32> -> vector<2x8x8xf32>
    "tpu.trace_stop"() : () -> ()
    %313 = vector.shape_cast %312 : vector<2x8x8xf32> to vector<16x8xf32>
    %314 = tpu.concatenate %253, %273, %293, %313 in 1 : vector<16x8xf32>, vector<16x8xf32>, vector<16x8xf32>, vector<16x8xf32> -> vector<16x32xf32>
    %c1_86 = arith.constant 1 : index
    %c0_87 = arith.constant 0 : index
    %c0_88 = arith.constant 0 : index
    %315 = vector.load %arg9[%c1_86, %c0_87, %c0_88] : memref<2x32x32xbf16, #tpu.memory_space<vmem>>, vector<1x32x32xbf16>
    %316 = vector.shape_cast %315 : vector<1x32x32xbf16> to vector<32x32xbf16>
    %317 = arith.truncf %314 : vector<16x32xf32> to vector<16x32xbf16>
    %cst_89 = arith.constant dense<0.000000e+00> : vector<16x32xf32>
    %318 = tpu.matmul %317, %316, %cst_89 {dimension_numbers = #tpu.dot_dimension_numbers<[1], [0], [0], [1], [0, 0, 1, 1], [], []>} : vector<16x32xbf16>, vector<32x32xbf16>, vector<16x32xf32> -> vector<16x32xf32>
    %319 = vector.extract_strided_slice %0 {offsets = [11, 0], sizes = [1, 32], strides = [1, 1]} : vector<19x128xf32> to vector<1x32xf32>
    %320 = vector.broadcast %319 : vector<1x32xf32> to vector<16x32xf32>
    %321 = arith.addf %318, %320 : vector<16x32xf32>
    %322 = arith.addf %225, %321 : vector<16x32xf32>
    %323 = vector.extract_strided_slice %0 {offsets = [12, 0], sizes = [1, 32], strides = [1, 1]} : vector<19x128xf32> to vector<1x32xf32>
    %324 = vector.extract_strided_slice %0 {offsets = [13, 0], sizes = [1, 32], strides = [1, 1]} : vector<19x128xf32> to vector<1x32xf32>
    %cst_90 = arith.constant dense<0.000000e+00> : vector<16xf32>
    %325 = vector.multi_reduction <add>, %322, %cst_90 [1] : vector<16x32xf32> to vector<16xf32>
    %326 = vector.shape_cast %325 : vector<16xf32> to vector<16x1xf32>
    %cst_91 = arith.constant 3.200000e+01 : f32
    %327 = vector.broadcast %cst_91 : f32 to vector<16x1xf32>
    %328 = arith.divf %326, %327 : vector<16x1xf32>
    %329 = vector.broadcast %328 : vector<16x1xf32> to vector<16x32xf32>
    %330 = arith.subf %322, %329 : vector<16x32xf32>
    %331 = arith.mulf %330, %330 : vector<16x32xf32>
    %cst_92 = arith.constant dense<0.000000e+00> : vector<16xf32>
    %332 = vector.multi_reduction <add>, %331, %cst_92 [1] : vector<16x32xf32> to vector<16xf32>
    %333 = vector.shape_cast %332 : vector<16xf32> to vector<16x1xf32>
    %cst_93 = arith.constant 3.200000e+01 : f32
    %334 = vector.broadcast %cst_93 : f32 to vector<16x1xf32>
    %335 = arith.divf %333, %334 : vector<16x1xf32>
    %336 = vector.broadcast %328 : vector<16x1xf32> to vector<16x32xf32>
    %337 = arith.subf %322, %336 : vector<16x32xf32>
    %cst_94 = arith.constant 9.99999996E-13 : f32
    %338 = vector.broadcast %cst_94 : f32 to vector<16x1xf32>
    %339 = arith.addf %335, %338 : vector<16x1xf32>
    %340 = math.rsqrt %339 : vector<16x1xf32>
    %341 = vector.broadcast %340 : vector<16x1xf32> to vector<16x32xf32>
    %342 = arith.mulf %337, %341 : vector<16x32xf32>
    %343 = vector.broadcast %323 : vector<1x32xf32> to vector<16x32xf32>
    %344 = arith.mulf %342, %343 : vector<16x32xf32>
    %345 = vector.broadcast %324 : vector<1x32xf32> to vector<16x32xf32>
    %346 = arith.addf %344, %345 : vector<16x32xf32>
    %c1_95 = arith.constant 1 : index
    %c0_96 = arith.constant 0 : index
    %c0_97 = arith.constant 0 : index
    %347 = vector.load %arg10[%c1_95, %c0_96, %c0_97] : memref<2x32x64xbf16, #tpu.memory_space<vmem>>, vector<1x32x64xbf16>
    %348 = vector.shape_cast %347 : vector<1x32x64xbf16> to vector<32x64xbf16>
    %349 = arith.truncf %346 : vector<16x32xf32> to vector<16x32xbf16>
    %cst_98 = arith.constant dense<0.000000e+00> : vector<16x64xf32>
    %350 = tpu.matmul %349, %348, %cst_98 {dimension_numbers = #tpu.dot_dimension_numbers<[1], [0], [0], [1], [0, 0, 1, 1], [], []>} : vector<16x32xbf16>, vector<32x64xbf16>, vector<16x64xf32> -> vector<16x64xf32>
    %351 = vector.extract_strided_slice %0 {offsets = [14, 0], sizes = [1, 64], strides = [1, 1]} : vector<19x128xf32> to vector<1x64xf32>
    %352 = vector.broadcast %351 : vector<1x64xf32> to vector<16x64xf32>
    %353 = arith.addf %350, %352 : vector<16x64xf32>
    %354 = arith.mulf %353, %353 : vector<16x64xf32>
    %355 = arith.mulf %353, %354 : vector<16x64xf32>
    %cst_99 = arith.constant 4.471500e-02 : f32
    %356 = vector.broadcast %cst_99 : f32 to vector<16x64xf32>
    %357 = arith.mulf %356, %355 : vector<16x64xf32>
    %358 = arith.addf %353, %357 : vector<16x64xf32>
    %cst_100 = arith.constant 0.797884583 : f32
    %359 = vector.broadcast %cst_100 : f32 to vector<16x64xf32>
    %360 = arith.mulf %359, %358 : vector<16x64xf32>
    %361 = math.tanh %360 : vector<16x64xf32>
    %cst_101 = arith.constant 1.000000e+00 : f32
    %362 = vector.broadcast %cst_101 : f32 to vector<16x64xf32>
    %363 = arith.addf %362, %361 : vector<16x64xf32>
    %cst_102 = arith.constant 5.000000e-01 : f32
    %364 = vector.broadcast %cst_102 : f32 to vector<16x64xf32>
    %365 = arith.mulf %364, %363 : vector<16x64xf32>
    %366 = arith.mulf %353, %365 : vector<16x64xf32>
    %c1_103 = arith.constant 1 : index
    %c0_104 = arith.constant 0 : index
    %c0_105 = arith.constant 0 : index
    %367 = vector.load %arg11[%c1_103, %c0_104, %c0_105] : memref<2x64x32xbf16, #tpu.memory_space<vmem>>, vector<1x64x32xbf16>
    %368 = vector.shape_cast %367 : vector<1x64x32xbf16> to vector<64x32xbf16>
    %369 = arith.truncf %366 : vector<16x64xf32> to vector<16x64xbf16>
    %cst_106 = arith.constant dense<0.000000e+00> : vector<16x32xf32>
    %370 = tpu.matmul %369, %368, %cst_106 {dimension_numbers = #tpu.dot_dimension_numbers<[1], [0], [0], [1], [0, 0, 1, 1], [], []>} : vector<16x64xbf16>, vector<64x32xbf16>, vector<16x32xf32> -> vector<16x32xf32>
    %371 = vector.extract_strided_slice %0 {offsets = [15, 0], sizes = [1, 32], strides = [1, 1]} : vector<19x128xf32> to vector<1x32xf32>
    %372 = vector.broadcast %371 : vector<1x32xf32> to vector<16x32xf32>
    %373 = arith.addf %370, %372 : vector<16x32xf32>
    %374 = arith.addf %346, %373 : vector<16x32xf32>
    %375 = vector.extract_strided_slice %0 {offsets = [16, 0], sizes = [1, 32], strides = [1, 1]} : vector<19x128xf32> to vector<1x32xf32>
    %376 = vector.extract_strided_slice %0 {offsets = [17, 0], sizes = [1, 32], strides = [1, 1]} : vector<19x128xf32> to vector<1x32xf32>
    %cst_107 = arith.constant dense<0.000000e+00> : vector<16xf32>
    %377 = vector.multi_reduction <add>, %374, %cst_107 [1] : vector<16x32xf32> to vector<16xf32>
    %378 = vector.shape_cast %377 : vector<16xf32> to vector<16x1xf32>
    %cst_108 = arith.constant 3.200000e+01 : f32
    %379 = vector.broadcast %cst_108 : f32 to vector<16x1xf32>
    %380 = arith.divf %378, %379 : vector<16x1xf32>
    %381 = vector.broadcast %380 : vector<16x1xf32> to vector<16x32xf32>
    %382 = arith.subf %374, %381 : vector<16x32xf32>
    %383 = arith.mulf %382, %382 : vector<16x32xf32>
    %cst_109 = arith.constant dense<0.000000e+00> : vector<16xf32>
    %384 = vector.multi_reduction <add>, %383, %cst_109 [1] : vector<16x32xf32> to vector<16xf32>
    %385 = vector.shape_cast %384 : vector<16xf32> to vector<16x1xf32>
    %cst_110 = arith.constant 3.200000e+01 : f32
    %386 = vector.broadcast %cst_110 : f32 to vector<16x1xf32>
    %387 = arith.divf %385, %386 : vector<16x1xf32>
    %388 = vector.broadcast %380 : vector<16x1xf32> to vector<16x32xf32>
    %389 = arith.subf %374, %388 : vector<16x32xf32>
    %cst_111 = arith.constant 9.99999996E-13 : f32
    %390 = vector.broadcast %cst_111 : f32 to vector<16x1xf32>
    %391 = arith.addf %387, %390 : vector<16x1xf32>
    %392 = math.rsqrt %391 : vector<16x1xf32>
    %393 = vector.broadcast %392 : vector<16x1xf32> to vector<16x32xf32>
    %394 = arith.mulf %389, %393 : vector<16x32xf32>
    %395 = vector.broadcast %375 : vector<1x32xf32> to vector<16x32xf32>
    %396 = arith.mulf %394, %395 : vector<16x32xf32>
    %397 = vector.broadcast %376 : vector<1x32xf32> to vector<16x32xf32>
    %398 = arith.addf %396, %397 : vector<16x32xf32>
    %c0_112 = arith.constant 0 : index
    %c0_113 = arith.constant 0 : index
    %399 = vector.load %arg12[%c0_112, %c0_113] : memref<32x128xbf16, #tpu.memory_space<vmem>>, vector<32x128xbf16>
    %400 = arith.truncf %398 : vector<16x32xf32> to vector<16x32xbf16>
    %cst_114 = arith.constant dense<0.000000e+00> : vector<16x128xf32>
    %401 = tpu.matmul %400, %399, %cst_114 {dimension_numbers = #tpu.dot_dimension_numbers<[1], [0], [0], [1], [0, 0, 1, 1], [], []>} : vector<16x32xbf16>, vector<32x128xbf16>, vector<16x128xf32> -> vector<16x128xf32>
    %402 = vector.extract_strided_slice %0 {offsets = [18, 0], sizes = [1, 128], strides = [1, 1]} : vector<19x128xf32> to vector<1x128xf32>
    %403 = vector.broadcast %402 : vector<1x128xf32> to vector<16x128xf32>
    %404 = arith.addf %401, %403 : vector<16x128xf32>
    %cst_115 = arith.constant dense<0xFF800000> : vector<16xf32>
    %405 = vector.multi_reduction <maximumf>, %404, %cst_115 [1] : vector<16x128xf32> to vector<16xf32>
    %406 = vector.shape_cast %405 : vector<16xf32> to vector<16x1xf32>
    %407 = vector.broadcast %406 : vector<16x1xf32> to vector<16x128xf32>
    %408 = arith.subf %404, %407 : vector<16x128xf32>
    %409 = math.exp %408 : vector<16x128xf32>
    %cst_116 = arith.constant dense<0.000000e+00> : vector<16xf32>
    %410 = vector.multi_reduction <add>, %409, %cst_116 [1] : vector<16x128xf32> to vector<16xf32>
    %411 = vector.shape_cast %410 : vector<16xf32> to vector<16x1xf32>
    %412 = vector.broadcast %411 : vector<16x1xf32> to vector<16x128xf32>
    %413 = arith.divf %409, %412 : vector<16x128xf32>
    %c0_117 = arith.constant 0 : index
    %c0_118 = arith.constant 0 : index
    %414 = vector.load %arg13[%c0_117, %c0_118] : memref<16x128xf32, #tpu.memory_space<vmem>>, vector<16x128xf32>
    tpu.vector_store %arg13[%c0_117, %c0_118], %413 {strides = array<i32>} : memref<16x128xf32, #tpu.memory_space<vmem>>, vector<16x128xf32>,
    return
  }
  func.func @transform_0(%arg0: i32) -> (i32, i32) {
    %c0_i32 = arith.constant 0 : i32
    %c0_i32_0 = arith.constant 0 : i32
    %c0_i32_1 = arith.constant 0 : i32
    return %c0_i32, %c0_i32_0 : i32, i32
  }
  func.func @transform_1(%arg0: i32) -> (i32, i32) {
    %c0_i32 = arith.constant 0 : i32
    %c0_i32_0 = arith.constant 0 : i32
    %c0_i32_1 = arith.constant 0 : i32
    return %c0_i32, %c0_i32_0 : i32, i32
  }
  func.func @transform_2(%arg0: i32) -> (i32, i32) {
    %c0_i32 = arith.constant 0 : i32
    %c0_i32_0 = arith.constant 0 : i32
    %c0_i32_1 = arith.constant 0 : i32
    return %c0_i32, %c0_i32_0 : i32, i32
  }
  func.func @transform_3(%arg0: i32) -> (i32, i32) {
    %c0_i32 = arith.constant 0 : i32
    %c0_i32_0 = arith.constant 0 : i32
    %c0_i32_1 = arith.constant 0 : i32
    return %c0_i32, %c0_i32_0 : i32, i32
  }
  func.func @transform_4(%arg0: i32) -> (i32, i32) {
    %c0_i32 = arith.constant 0 : i32
    %c0_i32_0 = arith.constant 0 : i32
    %c0_i32_1 = arith.constant 0 : i32
    return %c0_i32, %c0_i32_0 : i32, i32
  }
  func.func @transform_5(%arg0: i32) -> (i32, i32) {
    %c0_i32 = arith.constant 0 : i32
    %c0_i32_0 = arith.constant 0 : i32
    %c0_i32_1 = arith.constant 0 : i32
    return %c0_i32, %c0_i32_0 : i32, i32
  }
  func.func @transform_6(%arg0: i32) -> (i32, i32) {
    %c0_i32 = arith.constant 0 : i32
    %c0_i32_0 = arith.constant 0 : i32
    %c0_i32_1 = arith.constant 0 : i32
    return %c0_i32, %c0_i32_0 : i32, i32
  }
  func.func @transform_7(%arg0: i32) -> (i32, i32, i32) {
    %c0_i32 = arith.constant 0 : i32
    %c0_i32_0 = arith.constant 0 : i32
    %c0_i32_1 = arith.constant 0 : i32
    %c0_i32_2 = arith.constant 0 : i32
    return %c0_i32, %c0_i32_0, %c0_i32_1 : i32, i32, i32
  }
  func.func @transform_8(%arg0: i32) -> (i32, i32, i32) {
    %c0_i32 = arith.constant 0 : i32
    %c0_i32_0 = arith.constant 0 : i32
    %c0_i32_1 = arith.constant 0 : i32
    %c0_i32_2 = arith.constant 0 : i32
    return %c0_i32, %c0_i32_0, %c0_i32_1 : i32, i32, i32
  }
  func.func @transform_9(%arg0: i32) -> (i32, i32, i32) {
    %c0_i32 = arith.constant 0 : i32
    %c0_i32_0 = arith.constant 0 : i32
    %c0_i32_1 = arith.constant 0 : i32
    %c0_i32_2 = arith.constant 0 : i32
    return %c0_i32, %c0_i32_0, %c0_i32_1 : i32, i32, i32
  }
  func.func @transform_10(%arg0: i32) -> (i32, i32, i32) {
    %c0_i32 = arith.constant 0 : i32
    %c0_i32_0 = arith.constant 0 : i32
    %c0_i32_1 = arith.constant 0 : i32
    %c0_i32_2 = arith.constant 0 : i32
    return %c0_i32, %c0_i32_0, %c0_i32_1 : i32, i32, i32
  }
  func.func @transform_11(%arg0: i32) -> (i32, i32) {
    %c0_i32 = arith.constant 0 : i32
    %c0_i32_0 = arith.constant 0 : i32
    %c0_i32_1 = arith.constant 0 : i32
    return %c0_i32, %c0_i32_0 : i32, i32
  }
  func.func @transform_12(%arg0: i32) -> (i32, i32) {
    %c0_i32 = arith.constant 0 : i32
    %c0_i32_0 = arith.constant 0 : i32
    %c0_i32_1 = arith.constant 0 : i32
    return %c0_i32, %c0_i32_0 : i32, i32
  }
}

</mosaic_0001>

<llo_original>
// kernel: bert_lm_forward.1
$region0: #{bert_lm_forward.1}
  #allocation0 [shape = 'u32[]', space=smem, size = 0x4, offset = 0x4, fixed_abs, tag = 'smem constant byte address 0x4 - core index']
  #allocation1 [shape = 'u32[72,128]{1,0:T(1,128)}', space=vmem, size = 0x9000, scoped, tag = 'internal scratch']
  %s0 = inlined_call_operand.vmem [shape: s32[16,1], index: 0, kind: input, shape index: {}]
  %s1 = inlined_call_operand.vmem [shape: s32[16,1], index: 1, kind: input, shape index: {}]
  %s2 = inlined_call_operand.vmem [shape: f32[2,8], index: 2, kind: input, shape index: {}]
  %s3 = inlined_call_operand.vmem [shape: f32[16,32], index: 3, kind: input, shape index: {}]
  %s4 = inlined_call_operand.vmem [shape: f32[128,32], index: 4, kind: input, shape index: {}]
  %s5 = inlined_call_operand.vmem [shape: f32[2,32], index: 5, kind: input, shape index: {}]
  %s6 = inlined_call_operand.vmem [shape: f32[19,128], index: 6, kind: input, shape index: {}]
  %s7 = inlined_call_operand.vmem [shape: bf16[2,32,96], index: 7, kind: input, shape index: {}]
  %s8 = inlined_call_operand.vmem [shape: bf16[2,32,32], index: 8, kind: input, shape index: {}]
  %s9 = inlined_call_operand.vmem [shape: bf16[2,32,64], index: 9, kind: input, shape index: {}]
  %s10 = inlined_call_operand.vmem [shape: bf16[2,64,32], index: 10, kind: input, shape index: {}]
  %s11 = inlined_call_operand.vmem [shape: bf16[32,128], index: 11, kind: input, shape index: {}]
  %s12 = inlined_call_operand.hbm [shape: f32[16,128], index: 12, kind: output, shape index: {}]
  %s13 = sld [smem:[#allocation0]]
  $region58: #{bert_lm_forward.1} parent=0
    _
  %s15 = ssub.s32 1, %s13
  %s16 = scalar_select 0, %s15, %s13
  $region1: #{bert_lm_forward.1} parent=0
    #allocation2 [shape = 'u8[8192]{0}', space=vmem, size = 0x2000, scoped, tag = 'output window, operand 0, single buffered']
    #allocation3 [shape = 's32[1]{0}', space=sflag, size = 0x4, scoped, tag = 'scoped memory for bert_lm_forward.1']
    %17 = vsyncpa [#allocation3], 0
    // Predicated region
    $region2: #{bert_lm_forward.1} parent=1 // pred_check
      _
    $region3: #{bert_lm_forward.1} parent=1 // pred_check_branch
      %19 = sbr.rel (0) target = $region5
    $region4: #{bert_lm_forward.1} parent=1 // pred_region
      _
    $region5: #{bert_lm_forward.1} parent=1 // pred_fallthru
      _
    // Predicated region
    $region6: #{bert_lm_forward.1} parent=1 // pred_check
      _
    $region7: #{bert_lm_forward.1} parent=1 // pred_check_branch
      %21 = sbr.rel (0) target = $region9
    $region8: #{bert_lm_forward.1} parent=1 // pred_region
      _
    $region9: #{bert_lm_forward.1} parent=1 // pred_fallthru
      _
    // Predicated region
    $region10: #{bert_lm_forward.1} parent=1 // pred_check
      _
    $region11: #{bert_lm_forward.1} parent=1 // pred_check_branch
      %23 = sbr.rel (0) target = $region13
    $region12: #{bert_lm_forward.1} parent=1 // pred_region
      _
    $region13: #{bert_lm_forward.1} parent=1 // pred_fallthru
      _
    // Predicated region
    $region14: #{bert_lm_forward.1} parent=1 // pred_check
      _
    $region15: #{bert_lm_forward.1} parent=1 // pred_check_branch
      %25 = sbr.rel (0) target = $region17
    $region16: #{bert_lm_forward.1} parent=1 // pred_region
      _
    $region17: #{bert_lm_forward.1} parent=1 // pred_fallthru
      _
    // Predicated region
    $region18: #{bert_lm_forward.1} parent=1 // pred_check
      _
    $region19: #{bert_lm_forward.1} parent=1 // pred_check_branch
      %27 = sbr.rel (0) target = $region21
    $region20: #{bert_lm_forward.1} parent=1 // pred_region
      _
    $region21: #{bert_lm_forward.1} parent=1 // pred_fallthru
      _
    // Predicated region
    $region22: #{bert_lm_forward.1} parent=1 // pred_check
      _
    $region23: #{bert_lm_forward.1} parent=1 // pred_check_branch
      %29 = sbr.rel (0) target = $region25
    $region24: #{bert_lm_forward.1} parent=1 // pred_region
      _
    $region25: #{bert_lm_forward.1} parent=1 // pred_fallthru
      _
    // Predicated region
    $region26: #{bert_lm_forward.1} parent=1 // pred_check
      _
    $region27: #{bert_lm_forward.1} parent=1 // pred_check_branch
      %31 = sbr.rel (0) target = $region29
    $region28: #{bert_lm_forward.1} parent=1 // pred_region
      _
    $region29: #{bert_lm_forward.1} parent=1 // pred_fallthru
      _
    // Predicated region
    $region30: #{bert_lm_forward.1} parent=1 // pred_check
      _
    $region31: #{bert_lm_forward.1} parent=1 // pred_check_branch
      %33 = sbr.rel (0) target = $region33
    $region32: #{bert_lm_forward.1} parent=1 // pred_region
      _
    $region33: #{bert_lm_forward.1} parent=1 // pred_fallthru
      _
    // Predicated region
    $region34: #{bert_lm_forward.1} parent=1 // pred_check
      _
    $region35: #{bert_lm_forward.1} parent=1 // pred_check_branch
      %35 = sbr.rel (0) target = $region37
    $region36: #{bert_lm_forward.1} parent=1 // pred_region
      _
    $region37: #{bert_lm_forward.1} parent=1 // pred_fallthru
      _
    // Predicated region
    $region38: #{bert_lm_forward.1} parent=1 // pred_check
      _
    $region39: #{bert_lm_forward.1} parent=1 // pred_check_branch
      %37 = sbr.rel (0) target = $region41
    $region40: #{bert_lm_forward.1} parent=1 // pred_region
      _
    $region41: #{bert_lm_forward.1} parent=1 // pred_fallthru
      _
    // Predicated region
    $region42: #{bert_lm_forward.1} parent=1 // pred_check
      _
    $region43: #{bert_lm_forward.1} parent=1 // pred_check_branch
      %39 = sbr.rel (0) target = $region45
    $region44: #{bert_lm_forward.1} parent=1 // pred_region
      _
    $region45: #{bert_lm_forward.1} parent=1 // pred_fallthru
      _
    // Predicated region
    $region46: #{bert_lm_forward.1} parent=1 // pred_check
      _
    $region47: #{bert_lm_forward.1} parent=1 // pred_check_branch
      %41 = sbr.rel (0) target = $region49
    $region48: #{bert_lm_forward.1} parent=1 // pred_region
      _
    $region49: #{bert_lm_forward.1} parent=1 // pred_fallthru
      _
    %v43 = vld [vmem:[%s6] sm:$0xff]
    %v44 = vld [vmem:[%s6 + $0x8] sm:$0xff]
    %v45 = vld [vmem:[%s6 + $0x10] sm:$0x7]
    %v46 = vld [vmem:[%s0] sm:$0xff]
    %v47 = vld [vmem:[%s0 + $0x8] sm:$0xff]
    %v48 = vlaneseq
    %v49 = vand.u32 %v48, 127
    %50 = vset.pattern.permute.xlu0 0
    %51 = vperm.xlu0 %50, %v46
    %v52 = vpop.permute.xlu0 %51
    %53 = vset.pattern.permute.xlu0 0
    %54 = vperm.xlu0 %53, %v47
    %v55 = vpop.permute.xlu0 %54
    %vm56 = vcmp.eq.s32.totalorder %v49, %v52
    %vm57 = vcmp.eq.s32.totalorder %v49, %v55
    %v58 = vsel %vm56, 1, 0
    %v59 = vsel %vm57, 1, 0
    %v60 = vcvt.s32.f32 %v58
    %v61 = vcvt.s32.f32 %v59
    %v62 = vld [vmem:[%s4] sm:$0xff]
    %v63 = vld [vmem:[%s4 + $0x8] sm:$0xff]
    %v64 = vld [vmem:[%s4 + $0x10] sm:$0xff]
    %v65 = vld [vmem:[%s4 + $0x18] sm:$0xff]
    %v66 = vld [vmem:[%s4 + $0x20] sm:$0xff]
    %v67 = vld [vmem:[%s4 + $0x28] sm:$0xff]
    %v68 = vld [vmem:[%s4 + $0x30] sm:$0xff]
    %v69 = vld [vmem:[%s4 + $0x38] sm:$0xff]
    %v70 = vld [vmem:[%s4 + $0x40] sm:$0xff]
    %v71 = vld [vmem:[%s4 + $0x48] sm:$0xff]
    %v72 = vld [vmem:[%s4 + $0x50] sm:$0xff]
    %v73 = vld [vmem:[%s4 + $0x58] sm:$0xff]
    %v74 = vld [vmem:[%s4 + $0x60] sm:$0xff]
    %v75 = vld [vmem:[%s4 + $0x68] sm:$0xff]
    %v76 = vld [vmem:[%s4 + $0x70] sm:$0xff]
    %v77 = vld [vmem:[%s4 + $0x78] sm:$0xff]
    %v78 = vld [vmem:[%s1] sm:$0xff]
    %v79 = vld [vmem:[%s1 + $0x8] sm:$0xff]
    %v80 = vcvt.s32.f32 %v78
    %v81 = vcvt.s32.f32 %v79
    %v82 = vld [vmem:[%s5] sm:$0x1]
    %v83 = vsub.f32 1.0, %v80
    %v84 = vsub.f32 1.0, %v81
    %v85 = vperm.slane %v82, 0
    %87 = vset.pattern.permute.xlu0 0
    %88 = vperm.xlu0 %87, %v83
    %v89 = vpop.permute.xlu0 %88
    %92 = vset.pattern.permute.xlu0 0
    %93 = vperm.xlu0 %92, %v84
    %v94 = vpop.permute.xlu0 %93
    %v96 = vmul.f32 %v85, %v89
    %v97 = vmul.f32 %v85, %v94
    %v98 = vld [vmem:[%s5 + $0x1] sm:$0x1]
    %v99 = vperm.slane %v98, 0
    %101 = vset.pattern.permute.xlu0 0
    %102 = vperm.xlu0 %101, %v80
    %v103 = vpop.permute.xlu0 %102
    %106 = vset.pattern.permute.xlu0 0
    %107 = vperm.xlu0 %106, %v81
    %v108 = vpop.permute.xlu0 %107
    %v110 = vmul.f32 %v99, %v103
    %v111 = vmul.f32 %v99, %v108
    %v112 = vadd.f32 %v96, %v110
    %v113 = vadd.f32 %v97, %v111
    %114 = vmatpush.msra.mxu0 %v77
    %115 = vmatpush.msra.mxu0 %v76
    %116 = vmatpush.msra.mxu0 %v75
    %117 = vmatpush.msra.mxu0 %v74
    %118 = vmatpush.msra.mxu0 %v73
    %119 = vmatpush.msra.mxu0 %v72
    %120 = vmatpush.msra.mxu0 %v71
    %121 = vmatpush.msra.mxu0 %v70
    %122 = vmatpush.msra.mxu0 %v69
    %123 = vmatpush.msra.mxu0 %v68
    %124 = vmatpush.msra.mxu0 %v67
    %125 = vmatpush.msra.mxu0 %v66
    %126 = vmatpush.msra.mxu0 %v65
    %127 = vmatpush.msra.mxu0 %v64
    %128 = vmatpush.msra.mxu0 %v63
    %129 = vmatpush.msra.mxu0 %v62
    %130 = vmatmul.f32.gmra.mxu0 %v60
    %v131 = vpop.f32.mrf.mxu0
    %v132 = vadd.f32 %v112, %v131
    %133 = vmatmul.f32.gmra.mxu0 %v61
    %v134 = vpop.f32.mrf.mxu0
    %v135 = vadd.f32 %v113, %v134
    %136 = vdwg.mxu0
    %v137 = vld [vmem:[%s3] sm:$0xff]
    %v138 = vld [vmem:[%s3 + $0x8] sm:$0xff]
    %v139 = vadd.f32 %v132, %v137
    %v140 = vadd.f32 %v135, %v138
    %vm141 = vcmask 261120
    %v142 = vsel %vm141, %v139, 0.0
    %143 = vadd.xlane.f32.xlu0 %v142
    %v144 = vpop.xlane.xlu0 %143
    %v145 = vsel %vm141, %v140, 0.0
    %146 = vadd.xlane.f32.xlu0 %v145
    %v147 = vpop.xlane.xlu0 %146
    %v148 = vrcp.pop 32.0
    %v149 = vmul.f32 32.0, %v148
    %v150 = vsub.f32 1.0, %v149
    %v151 = vmul.f32 %v148, %v150
    %v152 = vadd.f32 %v148, %v151
    %vm153 = vweird.f32 %v148
    %v154 = vsel %vm153, %v148, %v152
    %v155 = vmul.f32 %v144, %v154
    %v156 = vmul.f32 %v147, %v154
    %v157 = vsub.f32 %v139, %v155
    %v158 = vsub.f32 %v140, %v156
    %v159 = vmul.f32 %v157, %v157
    %v160 = vmul.f32 %v158, %v158
    %v161 = vsel %vm141, %v159, 0.0
    %162 = vadd.xlane.f32.xlu0 %v161
    %v163 = vpop.xlane.xlu0 %162
    %v164 = vsel %vm141, %v160, 0.0
    %165 = vadd.xlane.f32.xlu0 %v164
    %v166 = vpop.xlane.xlu0 %165
    %v167 = vmul.f32 %v163, %v154
    %v168 = vmul.f32 %v166, %v154
    %v169 = vadd.f32 %v167, 1e-12
    %v170 = vadd.f32 %v168, 1e-12
    %v171 = vrsqrt.pop %v169
    %v172 = vmul.f32 %v171, %v169
    %v173 = vmul.f32 %v172, %v171
    %v174 = vmul.f32 0.5, %v173
    %v175 = vsub.f32 1.5, %v174
    %v176 = vmul.f32 %v171, %v175
    %vm177 = vweird.f32 %v169
    %vm178 = vweird.f32 %v171
    %vm179 = vmor %vm177, %vm178
    %v180 = vsel %vm179, %v171, %v176
    %v181 = vrsqrt.pop %v170
    %v182 = vmul.f32 %v181, %v170
    %v183 = vmul.f32 %v182, %v181
    %v184 = vmul.f32 0.5, %v183
    %v185 = vsub.f32 1.5, %v184
    %v186 = vmul.f32 %v181, %v185
    %vm187 = vweird.f32 %v170
    %vm188 = vweird.f32 %v181
    %vm189 = vmor %vm187, %vm188
    %v190 = vsel %vm189, %v181, %v186
    %v191 = vmul.f32 %v157, %v180
    %v192 = vmul.f32 %v158, %v190
    %v193 = vperm.slane %v43, 0
    %v194 = vmul.f32 %v191, %v193
    %v195 = vmul.f32 %v192, %v193
    %v196 = vperm.slane %v43, 1
    %v197 = vadd.f32 %v194, %v196
    %v198 = vadd.f32 %v195, %v196
    %v199 = vld [vmem:[%s2] sm:$0x3]
    %v201 = vrot.slane %v199, 1
    %v202 = vperm.slane %v199, 0
    %v203 = vperm.slane %v201, 0
    %v206 = vld [vmem:[%s7] sm:$0xf]
    %v207 = vld [vmem:[%s7 + $0x4] sm:$0xf]
    %v208 = vld [vmem:[%s7 + $0x8] sm:$0xf]
    %v209 = vld [vmem:[%s7 + $0xc] sm:$0xf]
    %v210 = vpack.c.bf16 %v198, %v197
    %v211 = vperm.slane %v43, 2
    %v216 = vunpack.c.l.b16 %v206
    %v217 = vunpack.c.l.b16 %v207
    %v218 = vunpack.c.l.b16 %v208
    %v219 = vunpack.c.l.b16 %v209
    %v220 = vpack.c.b16 %v217, %v216
    %v221 = vpack.c.b16 %v219, %v218
    %v225 = vsel %vm141, %v210, 0
    %227 = vmatpush.bf16.msra.mxu0 0
    %228 = vmatpush.bf16.msra.mxu0 0
    %229 = vmatpush.bf16.msra.mxu0 0
    %230 = vmatpush.bf16.msra.mxu0 0
    %231 = vmatpush.bf16.msra.mxu0 0
    %232 = vmatpush.bf16.msra.mxu0 0
    %233 = vmatpush.bf16.msra.mxu0 %v221
    %234 = vmatpush.bf16.msra.mxu0 %v220
    %235 = vmatmul.bf16.gmra.mxu0 %v225
    %v236 = vpop.f32.mrf.mxu0
    %v237 = vadd.f32 %v211, %v236
    %v238 = vpop.f32.mrf.mxu0
    %v239 = vadd.f32 %v211, %v238
    %240 = vdwg.mxu0
    %v241 = vpack.c.bf16 %v237, %v237
    %v242 = vpack.c.bf16 %v239, %v239
    %v244 = vunpack.c.l.b16 %v241
    %v245 = vpack.c.b16 %v244, %v244
    %246 = vrot.lane.b32.xlu0 %v245, 96
    %v247 = vpop.permute.xlu0 %246
    %vm248 = vcmask 64512
    %v250 = vsel %vm248, %v241, 0
    %v253 = vsel %vm248, %v247, 0
    %255 = vmatpush.bf16.xpose.msra.mxu0 0
    %256 = vmatpush.bf16.xpose.msra.mxu0 0
    %257 = vmatpush.bf16.xpose.msra.mxu0 0
    %258 = vmatpush.bf16.xpose.msra.mxu0 0
    %259 = vmatpush.bf16.xpose.msra.mxu0 0
    %260 = vmatpush.bf16.xpose.msra.mxu0 0
    %261 = vmatpush.bf16.xpose.msra.mxu0 0
    %262 = vmatpush.bf16.xpose.msra.mxu0 %v253
    %263 = vmatmul.bf16.gmra.mxu0 %v250
    %v264 = vpop.f32.mrf.mxu0
    %v265 = vadd.f32 %v202, %v264
    %v266 = vpop.f32.mrf.mxu0
    %267 = vdwg.mxu0
    %v269 = vunpack.c.l.b16 %v242
    %v270 = vpack.c.b16 %v269, %v269
    %271 = vrot.lane.b32.xlu0 %v270, 96
    %v272 = vpop.permute.xlu0 %271
    %v274 = vsel %vm248, %v242, 0
    %v277 = vsel %vm248, %v272, 0
    %279 = vmatpush.bf16.xpose.msra.mxu0 0
    %280 = vmatpush.bf16.xpose.msra.mxu0 0
    %281 = vmatpush.bf16.xpose.msra.mxu0 0
    %282 = vmatpush.bf16.xpose.msra.mxu0 0
    %283 = vmatpush.bf16.xpose.msra.mxu0 0
    %284 = vmatpush.bf16.xpose.msra.mxu0 0
    %285 = vmatpush.bf16.xpose.msra.mxu0 0
    %286 = vmatpush.bf16.xpose.msra.mxu0 %v277
    %287 = vmatmul.bf16.gmra.mxu0 %v274
    %v288 = vpop.f32.mrf.mxu0
    %v289 = vadd.f32 %v203, %v288
    %v290 = vpop.f32.mrf.mxu0
    %291 = vdwg.mxu0
    %v292 = vsel %vm248, %v265, -inf
    %293 = vmax.xlane.f32.xlu0 %v292
    %v294 = vpop.xlane.xlu0 %293
    %v295 = vsel %vm248, %v289, -inf
    %296 = vmax.xlane.f32.xlu0 %v295
    %v297 = vpop.xlane.xlu0 %296
    %v298 = vsub.f32 %v265, %v294
    %v299 = vsub.f32 %v289, %v297
    %v300 = vmul.f32 %v298, 1.442695
    %v301 = vpow.pop %v300
    %v302 = vmul.f32 %v299, 1.442695
    %v303 = vpow.pop %v302
    %v304 = vsel %vm248, %v301, 0.0
    %305 = vadd.xlane.f32.xlu0 %v304
    %v306 = vpop.xlane.xlu0 %305
    %v307 = vsel %vm248, %v303, 0.0
    %308 = vadd.xlane.f32.xlu0 %v307
    %v309 = vpop.xlane.xlu0 %308
    %v310 = vrcp.pop %v306
    %v311 = vmul.f32 %v306, %v310
    %v312 = vsub.f32 1.0, %v311
    %v313 = vmul.f32 %v310, %v312
    %v314 = vadd.f32 %v310, %v313
    %vm315 = vweird.f32 %v306
    %vm316 = vweird.f32 %v310
    %vm317 = vmor %vm315, %vm316
    %v318 = vsel %vm317, %v310, %v314
    %v319 = vand.u32 2147483647, %v306
    %vm320 = vcmp.eq.f32.partialorder %v319, 8.507059e+37
    %v321 = vand.u32 %v306, 2147483648
    %v322 = vor.u32 1.1754944e-38, %v321
    %v323 = vsel %vm320, %v322, %v318
    %v324 = vmul.f32 %v301, %v323
    %v325 = vrcp.pop %v309
    %v326 = vmul.f32 %v309, %v325
    %v327 = vsub.f32 1.0, %v326
    %v328 = vmul.f32 %v325, %v327
    %v329 = vadd.f32 %v325, %v328
    %vm330 = vweird.f32 %v309
    %vm331 = vweird.f32 %v325
    %vm332 = vmor %vm330, %vm331
    %v333 = vsel %vm332, %v325, %v329
    %v334 = vand.u32 2147483647, %v309
    %vm335 = vcmp.eq.f32.partialorder %v334, 8.507059e+37
    %v336 = vand.u32 %v309, 2147483648
    %v337 = vor.u32 1.1754944e-38, %v336
    %v338 = vsel %vm335, %v337, %v333
    %v339 = vmul.f32 %v303, %v338
    %v340 = vpack.c.bf16 %v324, %v324
    %v341 = vpack.c.bf16 %v339, %v339
    %342 = vrot.lane.b32.xlu0 %v245, 64
    %v343 = vpop.permute.xlu0 %342
    %v345 = vsel %vm248, %v340, 0
    %vm347 = vcmask 1043456
    %v349 = vsel %vm347, %v343, 0
    %351 = vmatpush.bf16.msra.mxu0 0
    %352 = vmatpush.bf16.msra.mxu0 0
    %353 = vmatpush.bf16.msra.mxu0 0
    %354 = vmatpush.bf16.msra.mxu0 0
    %355 = vmatpush.bf16.msra.mxu0 0
    %356 = vmatpush.bf16.msra.mxu0 0
    %357 = vmatpush.bf16.msra.mxu0 0
    %358 = vmatpush.bf16.msra.mxu0 %v349
    %359 = vmatmul.bf16.gmra.mxu0 %v345
    %v360 = vpop.f32.mrf.mxu0
    %v361 = vadd.f32 0.0, %v360
    %v362 = vpop.f32.mrf.mxu0
    %363 = vdwg.mxu0
    %364 = vrot.lane.b32.xlu0 %v270, 64
    %v365 = vpop.permute.xlu0 %364
    %v367 = vsel %vm248, %v341, 0
    %v370 = vsel %vm347, %v365, 0
    %372 = vmatpush.bf16.msra.mxu0 0
    %373 = vmatpush.bf16.msra.mxu0 0
    %374 = vmatpush.bf16.msra.mxu0 0
    %375 = vmatpush.bf16.msra.mxu0 0
    %376 = vmatpush.bf16.msra.mxu0 0
    %377 = vmatpush.bf16.msra.mxu0 0
    %378 = vmatpush.bf16.msra.mxu0 0
    %379 = vmatpush.bf16.msra.mxu0 %v370
    %380 = vmatmul.bf16.gmra.mxu0 %v367
    %v381 = vpop.f32.mrf.mxu0
    %v382 = vadd.f32 0.0, %v381
    %v383 = vpop.f32.mrf.mxu0
    %384 = vdwg.mxu0
    %385 = vrot.lane.b32.xlu0 %v245, 120
    %v386 = vpop.permute.xlu0 %385
    %387 = vrot.lane.b32.xlu0 %v245, 88
    %v388 = vpop.permute.xlu0 %387
    %v390 = vsel %vm248, %v386, 0
    %v393 = vsel %vm248, %v388, 0
    %395 = vmatpush.bf16.xpose.msra.mxu0 0
    %396 = vmatpush.bf16.xpose.msra.mxu0 0
    %397 = vmatpush.bf16.xpose.msra.mxu0 0
    %398 = vmatpush.bf16.xpose.msra.mxu0 0
    %399 = vmatpush.bf16.xpose.msra.mxu0 0
    %400 = vmatpush.bf16.xpose.msra.mxu0 0
    %401 = vmatpush.bf16.xpose.msra.mxu0 0
    %402 = vmatpush.bf16.xpose.msra.mxu0 %v393
    %403 = vmatmul.bf16.gmra.mxu0 %v390
    %v404 = vpop.f32.mrf.mxu0
    %v405 = vadd.f32 %v202, %v404
    %v406 = vpop.f32.mrf.mxu0
    %407 = vdwg.mxu0
    %408 = vrot.lane.b32.xlu0 %v270, 120
    %v409 = vpop.permute.xlu0 %408
    %410 = vrot.lane.b32.xlu0 %v270, 88
    %v411 = vpop.permute.xlu0 %410
    %v413 = vsel %vm248, %v409, 0
    %v416 = vsel %vm248, %v411, 0
    %418 = vmatpush.bf16.xpose.msra.mxu0 0
    %419 = vmatpush.bf16.xpose.msra.mxu0 0
    %420 = vmatpush.bf16.xpose.msra.mxu0 0
    %421 = vmatpush.bf16.xpose.msra.mxu0 0
    %422 = vmatpush.bf16.xpose.msra.mxu0 0
    %423 = vmatpush.bf16.xpose.msra.mxu0 0
    %424 = vmatpush.bf16.xpose.msra.mxu0 0
    %425 = vmatpush.bf16.xpose.msra.mxu0 %v416
    %426 = vmatmul.bf16.gmra.mxu0 %v413
    %v427 = vpop.f32.mrf.mxu0
    %v428 = vadd.f32 %v203, %v427
    %v429 = vpop.f32.mrf.mxu0
    %430 = vdwg.mxu0
    %v431 = vsel %vm248, %v405, -inf
    %432 = vmax.xlane.f32.xlu0 %v431
    %v433 = vpop.xlane.xlu0 %432
    %v434 = vsel %vm248, %v428, -inf
    %435 = vmax.xlane.f32.xlu0 %v434
    %v436 = vpop.xlane.xlu0 %435
    %v437 = vsub.f32 %v405, %v433
    %v438 = vsub.f32 %v428, %v436
    %v439 = vmul.f32 %v437, 1.442695
    %v440 = vpow.pop %v439
    %v441 = vmul.f32 %v438, 1.442695
    %v442 = vpow.pop %v441
    %v443 = vsel %vm248, %v440, 0.0
    %444 = vadd.xlane.f32.xlu0 %v443
    %v445 = vpop.xlane.xlu0 %444
    %v446 = vsel %vm248, %v442, 0.0
    %447 = vadd.xlane.f32.xlu0 %v446
    %v448 = vpop.xlane.xlu0 %447
    %v449 = vrcp.pop %v445
    %v450 = vmul.f32 %v445, %v449
    %v451 = vsub.f32 1.0, %v450
    %v452 = vmul.f32 %v449, %v451
    %v453 = vadd.f32 %v449, %v452
    %vm454 = vweird.f32 %v445
    %vm455 = vweird.f32 %v449
    %vm456 = vmor %vm454, %vm455
    %v457 = vsel %vm456, %v449, %v453
    %v458 = vand.u32 2147483647, %v445
    %vm459 = vcmp.eq.f32.partialorder %v458, 8.507059e+37
    %v460 = vand.u32 %v445, 2147483648
    %v461 = vor.u32 1.1754944e-38, %v460
    %v462 = vsel %vm459, %v461, %v457
    %v463 = vmul.f32 %v440, %v462
    %v464 = vrcp.pop %v448
    %v465 = vmul.f32 %v448, %v464
    %v466 = vsub.f32 1.0, %v465
    %v467 = vmul.f32 %v464, %v466
    %v468 = vadd.f32 %v464, %v467
    %vm469 = vweird.f32 %v448
    %vm470 = vweird.f32 %v464
    %vm471 = vmor %vm469, %vm470
    %v472 = vsel %vm471, %v464, %v468
    %v473 = vand.u32 2147483647, %v448
    %vm474 = vcmp.eq.f32.partialorder %v473, 8.507059e+37
    %v475 = vand.u32 %v448, 2147483648
    %v476 = vor.u32 1.1754944e-38, %v475
    %v477 = vsel %vm474, %v476, %v472
    %v478 = vmul.f32 %v442, %v477
    %v479 = vpack.c.bf16 %v463, %v463
    %v480 = vpack.c.bf16 %v478, %v478
    %481 = vrot.lane.b32.xlu0 %v245, 56
    %v482 = vpop.permute.xlu0 %481
    %v484 = vsel %vm248, %v479, 0
    %v487 = vsel %vm347, %v482, 0
    %489 = vmatpush.bf16.msra.mxu0 0
    %490 = vmatpush.bf16.msra.mxu0 0
    %491 = vmatpush.bf16.msra.mxu0 0
    %492 = vmatpush.bf16.msra.mxu0 0
    %493 = vmatpush.bf16.msra.mxu0 0
    %494 = vmatpush.bf16.msra.mxu0 0
    %495 = vmatpush.bf16.msra.mxu0 0
    %496 = vmatpush.bf16.msra.mxu0 %v487
    %497 = vmatmul.bf16.gmra.mxu0 %v484
    %v498 = vpop.f32.mrf.mxu0
    %v499 = vadd.f32 0.0, %v498
    %v500 = vpop.f32.mrf.mxu0
    %501 = vdwg.mxu0
    %502 = vrot.lane.b32.xlu0 %v270, 56
    %v503 = vpop.permute.xlu0 %502
    %v505 = vsel %vm248, %v480, 0
    %v508 = vsel %vm347, %v503, 0
    %510 = vmatpush.bf16.msra.mxu0 0
    %511 = vmatpush.bf16.msra.mxu0 0
    %512 = vmatpush.bf16.msra.mxu0 0
    %513 = vmatpush.bf16.msra.mxu0 0
    %514 = vmatpush.bf16.msra.mxu0 0
    %515 = vmatpush.bf16.msra.mxu0 0
    %516 = vmatpush.bf16.msra.mxu0 0
    %517 = vmatpush.bf16.msra.mxu0 %v508
    %518 = vmatmul.bf16.gmra.mxu0 %v505
    %v519 = vpop.f32.mrf.mxu0
    %v520 = vadd.f32 0.0, %v519
    %v521 = vpop.f32.mrf.mxu0
    %522 = vdwg.mxu0
    %523 = vrot.lane.b32.xlu0 %v245, 112
    %v524 = vpop.permute.xlu0 %523
    %525 = vrot.lane.b32.xlu0 %v245, 80
    %v526 = vpop.permute.xlu0 %525
    %v528 = vsel %vm248, %v524, 0
    %v531 = vsel %vm248, %v526, 0
    %533 = vmatpush.bf16.xpose.msra.mxu0 0
    %534 = vmatpush.bf16.xpose.msra.mxu0 0
    %535 = vmatpush.bf16.xpose.msra.mxu0 0
    %536 = vmatpush.bf16.xpose.msra.mxu0 0
    %537 = vmatpush.bf16.xpose.msra.mxu0 0
    %538 = vmatpush.bf16.xpose.msra.mxu0 0
    %539 = vmatpush.bf16.xpose.msra.mxu0 0
    %540 = vmatpush.bf16.xpose.msra.mxu0 %v531
    %541 = vmatmul.bf16.gmra.mxu0 %v528
    %v542 = vpop.f32.mrf.mxu0
    %v543 = vadd.f32 %v202, %v542
    %v544 = vpop.f32.mrf.mxu0
    %545 = vdwg.mxu0
    %546 = vrot.lane.b32.xlu0 %v270, 112
    %v547 = vpop.permute.xlu0 %546
    %548 = vrot.lane.b32.xlu0 %v270, 80
    %v549 = vpop.permute.xlu0 %548
    %v551 = vsel %vm248, %v547, 0
    %v554 = vsel %vm248, %v549, 0
    %556 = vmatpush.bf16.xpose.msra.mxu0 0
    %557 = vmatpush.bf16.xpose.msra.mxu0 0
    %558 = vmatpush.bf16.xpose.msra.mxu0 0
    %559 = vmatpush.bf16.xpose.msra.mxu0 0
    %560 = vmatpush.bf16.xpose.msra.mxu0 0
    %561 = vmatpush.bf16.xpose.msra.mxu0 0
    %562 = vmatpush.bf16.xpose.msra.mxu0 0
    %563 = vmatpush.bf16.xpose.msra.mxu0 %v554
    %564 = vmatmul.bf16.gmra.mxu0 %v551
    %v565 = vpop.f32.mrf.mxu0
    %v566 = vadd.f32 %v203, %v565
    %v567 = vpop.f32.mrf.mxu0
    %568 = vdwg.mxu0
    %v569 = vsel %vm248, %v543, -inf
    %570 = vmax.xlane.f32.xlu0 %v569
    %v571 = vpop.xlane.xlu0 %570
    %v572 = vsel %vm248, %v566, -inf
    %573 = vmax.xlane.f32.xlu0 %v572
    %v574 = vpop.xlane.xlu0 %573
    %v575 = vsub.f32 %v543, %v571
    %v576 = vsub.f32 %v566, %v574
    %v577 = vmul.f32 %v575, 1.442695
    %v578 = vpow.pop %v577
    %v579 = vmul.f32 %v576, 1.442695
    %v580 = vpow.pop %v579
    %v581 = vsel %vm248, %v578, 0.0
    %582 = vadd.xlane.f32.xlu0 %v581
    %v583 = vpop.xlane.xlu0 %582
    %v584 = vsel %vm248, %v580, 0.0
    %585 = vadd.xlane.f32.xlu0 %v584
    %v586 = vpop.xlane.xlu0 %585
    %v587 = vrcp.pop %v583
    %v588 = vmul.f32 %v583, %v587
    %v589 = vsub.f32 1.0, %v588
    %v590 = vmul.f32 %v587, %v589
    %v591 = vadd.f32 %v587, %v590
    %vm592 = vweird.f32 %v583
    %vm593 = vweird.f32 %v587
    %vm594 = vmor %vm592, %vm593
    %v595 = vsel %vm594, %v587, %v591
    %v596 = vand.u32 2147483647, %v583
    %vm597 = vcmp.eq.f32.partialorder %v596, 8.507059e+37
    %v598 = vand.u32 %v583, 2147483648
    %v599 = vor.u32 1.1754944e-38, %v598
    %v600 = vsel %vm597, %v599, %v595
    %v601 = vmul.f32 %v578, %v600
    %v602 = vrcp.pop %v586
    %v603 = vmul.f32 %v586, %v602
    %v604 = vsub.f32 1.0, %v603
    %v605 = vmul.f32 %v602, %v604
    %v606 = vadd.f32 %v602, %v605
    %vm607 = vweird.f32 %v586
    %vm608 = vweird.f32 %v602
    %vm609 = vmor %vm607, %vm608
    %v610 = vsel %vm609, %v602, %v606
    %v611 = vand.u32 2147483647, %v586
    %vm612 = vcmp.eq.f32.partialorder %v611, 8.507059e+37
    %v613 = vand.u32 %v586, 2147483648
    %v614 = vor.u32 1.1754944e-38, %v613
    %v615 = vsel %vm612, %v614, %v610
    %v616 = vmul.f32 %v580, %v615
    %v617 = vpack.c.bf16 %v601, %v601
    %v618 = vpack.c.bf16 %v616, %v616
    %619 = vrot.lane.b32.xlu0 %v245, 48
    %v620 = vpop.permute.xlu0 %619
    %v622 = vsel %vm248, %v617, 0
    %v625 = vsel %vm347, %v620, 0
    %627 = vmatpush.bf16.msra.mxu0 0
    %628 = vmatpush.bf16.msra.mxu0 0
    %629 = vmatpush.bf16.msra.mxu0 0
    %630 = vmatpush.bf16.msra.mxu0 0
    %631 = vmatpush.bf16.msra.mxu0 0
    %632 = vmatpush.bf16.msra.mxu0 0
    %633 = vmatpush.bf16.msra.mxu0 0
    %634 = vmatpush.bf16.msra.mxu0 %v625
    %635 = vmatmul.bf16.gmra.mxu0 %v622
    %v636 = vpop.f32.mrf.mxu0
    %v637 = vadd.f32 0.0, %v636
    %v638 = vpop.f32.mrf.mxu0
    %639 = vdwg.mxu0
    %640 = vrot.lane.b32.xlu0 %v270, 48
    %v641 = vpop.permute.xlu0 %640
    %v643 = vsel %vm248, %v618, 0
    %v646 = vsel %vm347, %v641, 0
    %648 = vmatpush.bf16.msra.mxu0 0
    %649 = vmatpush.bf16.msra.mxu0 0
    %650 = vmatpush.bf16.msra.mxu0 0
    %651 = vmatpush.bf16.msra.mxu0 0
    %652 = vmatpush.bf16.msra.mxu0 0
    %653 = vmatpush.bf16.msra.mxu0 0
    %654 = vmatpush.bf16.msra.mxu0 0
    %655 = vmatpush.bf16.msra.mxu0 %v646
    %656 = vmatmul.bf16.gmra.mxu0 %v643
    %v657 = vpop.f32.mrf.mxu0
    %v658 = vadd.f32 0.0, %v657
    %v659 = vpop.f32.mrf.mxu0
    %660 = vdwg.mxu0
    %661 = vrot.lane.b32.xlu0 %v245, 104
    %v662 = vpop.permute.xlu0 %661
    %663 = vrot.lane.b32.xlu0 %v245, 72
    %v664 = vpop.permute.xlu0 %663
    %v666 = vsel %vm248, %v662, 0
    %v669 = vsel %vm248, %v664, 0
    %671 = vmatpush.bf16.xpose.msra.mxu0 0
    %672 = vmatpush.bf16.xpose.msra.mxu0 0
    %673 = vmatpush.bf16.xpose.msra.mxu0 0
    %674 = vmatpush.bf16.xpose.msra.mxu0 0
    %675 = vmatpush.bf16.xpose.msra.mxu0 0
    %676 = vmatpush.bf16.xpose.msra.mxu0 0
    %677 = vmatpush.bf16.xpose.msra.mxu0 0
    %678 = vmatpush.bf16.xpose.msra.mxu0 %v669
    %679 = vmatmul.bf16.gmra.mxu0 %v666
    %v680 = vpop.f32.mrf.mxu0
    %v681 = vadd.f32 %v202, %v680
    %v682 = vpop.f32.mrf.mxu0
    %683 = vdwg.mxu0
    %684 = vrot.lane.b32.xlu0 %v270, 104
    %v685 = vpop.permute.xlu0 %684
    %686 = vrot.lane.b32.xlu0 %v270, 72
    %v687 = vpop.permute.xlu0 %686
    %v689 = vsel %vm248, %v685, 0
    %v692 = vsel %vm248, %v687, 0
    %694 = vmatpush.bf16.xpose.msra.mxu0 0
    %695 = vmatpush.bf16.xpose.msra.mxu0 0
    %696 = vmatpush.bf16.xpose.msra.mxu0 0
    %697 = vmatpush.bf16.xpose.msra.mxu0 0
    %698 = vmatpush.bf16.xpose.msra.mxu0 0
    %699 = vmatpush.bf16.xpose.msra.mxu0 0
    %700 = vmatpush.bf16.xpose.msra.mxu0 0
    %701 = vmatpush.bf16.xpose.msra.mxu0 %v692
    %702 = vmatmul.bf16.gmra.mxu0 %v689
    %v703 = vpop.f32.mrf.mxu0
    %v704 = vadd.f32 %v203, %v703
    %v705 = vpop.f32.mrf.mxu0
    %706 = vdwg.mxu0
    %v707 = vsel %vm248, %v681, -inf
    %708 = vmax.xlane.f32.xlu0 %v707
    %v709 = vpop.xlane.xlu0 %708
    %v710 = vsel %vm248, %v704, -inf
    %711 = vmax.xlane.f32.xlu0 %v710
    %v712 = vpop.xlane.xlu0 %711
    %v713 = vsub.f32 %v681, %v709
    %v714 = vsub.f32 %v704, %v712
    %v715 = vmul.f32 %v713, 1.442695
    %v716 = vpow.pop %v715
    %v717 = vmul.f32 %v714, 1.442695
    %v718 = vpow.pop %v717
    %v719 = vsel %vm248, %v716, 0.0
    %720 = vadd.xlane.f32.xlu0 %v719
    %v721 = vpop.xlane.xlu0 %720
    %v722 = vsel %vm248, %v718, 0.0
    %723 = vadd.xlane.f32.xlu0 %v722
    %v724 = vpop.xlane.xlu0 %723
    %v725 = vrcp.pop %v721
    %v726 = vmul.f32 %v721, %v725
    %v727 = vsub.f32 1.0, %v726
    %v728 = vmul.f32 %v725, %v727
    %v729 = vadd.f32 %v725, %v728
    %vm730 = vweird.f32 %v721
    %vm731 = vweird.f32 %v725
    %vm732 = vmor %vm730, %vm731
    %v733 = vsel %vm732, %v725, %v729
    %v734 = vand.u32 2147483647, %v721
    %vm735 = vcmp.eq.f32.partialorder %v734, 8.507059e+37
    %v736 = vand.u32 %v721, 2147483648
    %v737 = vor.u32 1.1754944e-38, %v736
    %v738 = vsel %vm735, %v737, %v733
    %v739 = vmul.f32 %v716, %v738
    %v740 = vrcp.pop %v724
    %v741 = vmul.f32 %v724, %v740
    %v742 = vsub.f32 1.0, %v741
    %v743 = vmul.f32 %v740, %v742
    %v744 = vadd.f32 %v740, %v743
    %vm745 = vweird.f32 %v724
    %vm746 = vweird.f32 %v740
    %vm747 = vmor %vm745, %vm746
    %v748 = vsel %vm747, %v740, %v744
    %v749 = vand.u32 2147483647, %v724
    %vm750 = vcmp.eq.f32.partialorder %v749, 8.507059e+37
    %v751 = vand.u32 %v724, 2147483648
    %v752 = vor.u32 1.1754944e-38, %v751
    %v753 = vsel %vm750, %v752, %v748
    %v754 = vmul.f32 %v718, %v753
    %v755 = vpack.c.bf16 %v739, %v739
    %v756 = vpack.c.bf16 %v754, %v754
    %757 = vrot.lane.b32.xlu0 %v245, 40
    %v758 = vpop.permute.xlu0 %757
    %v760 = vsel %vm248, %v755, 0
    %v763 = vsel %vm347, %v758, 0
    %765 = vmatpush.bf16.msra.mxu0 0
    %766 = vmatpush.bf16.msra.mxu0 0
    %767 = vmatpush.bf16.msra.mxu0 0
    %768 = vmatpush.bf16.msra.mxu0 0
    %769 = vmatpush.bf16.msra.mxu0 0
    %770 = vmatpush.bf16.msra.mxu0 0
    %771 = vmatpush.bf16.msra.mxu0 0
    %772 = vmatpush.bf16.msra.mxu0 %v763
    %773 = vmatmul.bf16.gmra.mxu0 %v760
    %v774 = vpop.f32.mrf.mxu0
    %v775 = vadd.f32 0.0, %v774
    %v776 = vpop.f32.mrf.mxu0
    %777 = vdwg.mxu0
    %778 = vrot.lane.b32.xlu0 %v270, 40
    %v779 = vpop.permute.xlu0 %778
    %v781 = vsel %vm248, %v756, 0
    %v784 = vsel %vm347, %v779, 0
    %786 = vmatpush.bf16.msra.mxu0 0
    %787 = vmatpush.bf16.msra.mxu0 0
    %788 = vmatpush.bf16.msra.mxu0 0
    %789 = vmatpush.bf16.msra.mxu0 0
    %790 = vmatpush.bf16.msra.mxu0 0
    %791 = vmatpush.bf16.msra.mxu0 0
    %792 = vmatpush.bf16.msra.mxu0 0
    %793 = vmatpush.bf16.msra.mxu0 %v784
    %794 = vmatmul.bf16.gmra.mxu0 %v781
    %v795 = vpop.f32.mrf.mxu0
    %v796 = vadd.f32 0.0, %v795
    %v797 = vpop.f32.mrf.mxu0
    %798 = vdwg.mxu0
    %801 = vrot.lane.b32.xlu0 %v499, 8
    %v802 = vpop.permute.xlu0 %801
    %803 = vrot.lane.b32.xlu0 %v520, 8
    %v804 = vpop.permute.xlu0 %803
    %809 = vrot.lane.b32.xlu0 %v637, 16
    %v810 = vpop.permute.xlu0 %809
    %811 = vrot.lane.b32.xlu0 %v658, 16
    %v812 = vpop.permute.xlu0 %811
    %817 = vrot.lane.b32.xlu0 %v775, 24
    %v818 = vpop.permute.xlu0 %817
    %819 = vrot.lane.b32.xlu0 %v796, 24
    %v820 = vpop.permute.xlu0 %819
    %v823 = vsel %vm248, %v361, %v802
    %v824 = vsel %vm248, %v382, %v804
    %vm825 = vcmask 130048
    %v826 = vsel %vm825, %v823, %v810
    %v827 = vsel %vm825, %v824, %v812
    %vm828 = vcmask 195584
    %v829 = vsel %vm828, %v826, %v818
    %v830 = vsel %vm828, %v827, %v820
    %v831 = vld [vmem:[%s8] sm:$0xf]
    %v832 = vld [vmem:[%s8 + $0x4] sm:$0xf]
    %v833 = vld [vmem:[%s8 + $0x8] sm:$0xf]
    %v834 = vld [vmem:[%s8 + $0xc] sm:$0xf]
    %v835 = vpack.c.bf16 %v830, %v829
    %v836 = vperm.slane %v43, 3
    %v841 = vunpack.c.l.b16 %v831
    %v842 = vunpack.c.l.b16 %v832
    %v843 = vunpack.c.l.b16 %v833
    %v844 = vunpack.c.l.b16 %v834
    %v845 = vpack.c.b16 %v842, %v841
    %v846 = vpack.c.b16 %v844, %v843
    %v850 = vsel %vm141, %v835, 0
    %852 = vmatpush.bf16.msra.mxu0 0
    %853 = vmatpush.bf16.msra.mxu0 0
    %854 = vmatpush.bf16.msra.mxu0 0
    %855 = vmatpush.bf16.msra.mxu0 0
    %856 = vmatpush.bf16.msra.mxu0 0
    %857 = vmatpush.bf16.msra.mxu0 0
    %858 = vmatpush.bf16.msra.mxu0 %v846
    %859 = vmatpush.bf16.msra.mxu0 %v845
    %860 = vmatmul.bf16.gmra.mxu0 %v850
    %v861 = vpop.f32.mrf.mxu0
    %v862 = vadd.f32 %v836, %v861
    %v863 = vpop.f32.mrf.mxu0
    %v864 = vadd.f32 %v836, %v863
    %865 = vdwg.mxu0
    %v866 = vadd.f32 %v197, %v862
    %v867 = vadd.f32 %v198, %v864
    %v868 = vsel %vm141, %v866, 0.0
    %869 = vadd.xlane.f32.xlu0 %v868
    %v870 = vpop.xlane.xlu0 %869
    %v871 = vsel %vm141, %v867, 0.0
    %872 = vadd.xlane.f32.xlu0 %v871
    %v873 = vpop.xlane.xlu0 %872
    %v874 = vmul.f32 %v870, %v154
    %v875 = vmul.f32 %v873, %v154
    %v876 = vsub.f32 %v866, %v874
    %v877 = vsub.f32 %v867, %v875
    %v878 = vmul.f32 %v876, %v876
    %v879 = vmul.f32 %v877, %v877
    %v880 = vsel %vm141, %v878, 0.0
    %881 = vadd.xlane.f32.xlu0 %v880
    %v882 = vpop.xlane.xlu0 %881
    %v883 = vsel %vm141, %v879, 0.0
    %884 = vadd.xlane.f32.xlu0 %v883
    %v885 = vpop.xlane.xlu0 %884
    %v886 = vmul.f32 %v882, %v154
    %v887 = vmul.f32 %v885, %v154
    %v888 = vadd.f32 %v886, 1e-12
    %v889 = vadd.f32 %v887, 1e-12
    %v890 = vrsqrt.pop %v888
    %v891 = vmul.f32 %v890, %v888
    %v892 = vmul.f32 %v891, %v890
    %v893 = vmul.f32 0.5, %v892
    %v894 = vsub.f32 1.5, %v893
    %v895 = vmul.f32 %v890, %v894
    %vm896 = vweird.f32 %v888
    %vm897 = vweird.f32 %v890
    %vm898 = vmor %vm896, %vm897
    %v899 = vsel %vm898, %v890, %v895
    %v900 = vrsqrt.pop %v889
    %v901 = vmul.f32 %v900, %v889
    %v902 = vmul.f32 %v901, %v900
    %v903 = vmul.f32 0.5, %v902
    %v904 = vsub.f32 1.5, %v903
    %v905 = vmul.f32 %v900, %v904
    %vm906 = vweird.f32 %v889
    %vm907 = vweird.f32 %v900
    %vm908 = vmor %vm906, %vm907
    %v909 = vsel %vm908, %v900, %v905
    %v910 = vmul.f32 %v876, %v899
    %v911 = vmul.f32 %v877, %v909
    %v912 = vperm.slane %v43, 4
    %v913 = vmul.f32 %v910, %v912
    %v914 = vmul.f32 %v911, %v912
    %v915 = vperm.slane %v43, 5
    %v916 = vadd.f32 %v913, %v915
    %v917 = vadd.f32 %v914, %v915
    %v918 = vld [vmem:[%s9] sm:$0xf]
    %v919 = vld [vmem:[%s9 + $0x4] sm:$0xf]
    %v920 = vld [vmem:[%s9 + $0x8] sm:$0xf]
    %v921 = vld [vmem:[%s9 + $0xc] sm:$0xf]
    %v922 = vpack.c.bf16 %v917, %v916
    %v923 = vperm.slane %v43, 6
    %v928 = vunpack.c.l.b16 %v918
    %v929 = vunpack.c.l.b16 %v919
    %v930 = vunpack.c.l.b16 %v920
    %v931 = vunpack.c.l.b16 %v921
    %v932 = vpack.c.b16 %v929, %v928
    %v933 = vpack.c.b16 %v931, %v930
    %v937 = vsel %vm141, %v922, 0
    %939 = vmatpush.bf16.msra.mxu0 0
    %940 = vmatpush.bf16.msra.mxu0 0
    %941 = vmatpush.bf16.msra.mxu0 0
    %942 = vmatpush.bf16.msra.mxu0 0
    %943 = vmatpush.bf16.msra.mxu0 0
    %944 = vmatpush.bf16.msra.mxu0 0
    %945 = vmatpush.bf16.msra.mxu0 %v933
    %946 = vmatpush.bf16.msra.mxu0 %v932
    %947 = vmatmul.bf16.gmra.mxu0 %v937
    %v948 = vpop.f32.mrf.mxu0
    %v949 = vadd.f32 %v923, %v948
    %v950 = vpop.f32.mrf.mxu0
    %v951 = vadd.f32 %v923, %v950
    %952 = vdwg.mxu0
    %v953 = vmul.f32 %v949, %v949
    %v954 = vmul.f32 %v951, %v951
    %v955 = vmul.f32 %v949, %v953
    %v956 = vmul.f32 %v951, %v954
    %v957 = vmul.f32 %v955, 0.044715
    %v958 = vmul.f32 %v956, 0.044715
    %v959 = vadd.f32 %v949, %v957
    %v960 = vadd.f32 %v951, %v958
    %v961 = vmul.f32 %v959, 0.7978846
    %v962 = vmul.f32 %v960, 0.7978846
    %v963 = vtanh.pop %v961
    %v964 = vtanh.pop %v962
    %v965 = vadd.f32 %v963, 1.0
    %v966 = vadd.f32 %v964, 1.0
    %v967 = vmul.f32 %v965, 0.5
    %v968 = vmul.f32 %v966, 0.5
    %v969 = vmul.f32 %v949, %v967
    %v970 = vmul.f32 %v951, %v968
    %v971 = vld [vmem:[%s10] sm:$0xf]
    %v972 = vld [vmem:[%s10 + $0x4] sm:$0xf]
    %v973 = vld [vmem:[%s10 + $0x8] sm:$0xf]
    %v974 = vld [vmem:[%s10 + $0xc] sm:$0xf]
    %v975 = vld [vmem:[%s10 + $0x10] sm:$0xf]
    %v976 = vld [vmem:[%s10 + $0x14] sm:$0xf]
    %v977 = vld [vmem:[%s10 + $0x18] sm:$0xf]
    %v978 = vld [vmem:[%s10 + $0x1c] sm:$0xf]
    %v979 = vpack.c.bf16 %v970, %v969
    %v980 = vperm.slane %v43, 7
    %v989 = vunpack.c.l.b16 %v971
    %v990 = vunpack.c.l.b16 %v972
    %v991 = vunpack.c.l.b16 %v973
    %v992 = vunpack.c.l.b16 %v974
    %v993 = vunpack.c.l.b16 %v975
    %v994 = vunpack.c.l.b16 %v976
    %v995 = vunpack.c.l.b16 %v977
    %v996 = vunpack.c.l.b16 %v978
    %v997 = vpack.c.b16 %v990, %v989
    %v998 = vpack.c.b16 %v992, %v991
    %v999 = vpack.c.b16 %v994, %v993
    %v1000 = vpack.c.b16 %v996, %v995
    %vm1005 = vcmask 523264
    %v1007 = vsel %vm1005, %v979, 0
    %1009 = vmatpush.bf16.msra.mxu0 0
    %1010 = vmatpush.bf16.msra.mxu0 0
    %1011 = vmatpush.bf16.msra.mxu0 0
    %1012 = vmatpush.bf16.msra.mxu0 0
    %1013 = vmatpush.bf16.msra.mxu0 %v1000
    %1014 = vmatpush.bf16.msra.mxu0 %v999
    %1015 = vmatpush.bf16.msra.mxu0 %v998
    %1016 = vmatpush.bf16.msra.mxu0 %v997
    %1017 = vmatmul.bf16.gmra.mxu0 %v1007
    %v1018 = vpop.f32.mrf.mxu0
    %v1019 = vadd.f32 %v980, %v1018
    %v1020 = vpop.f32.mrf.mxu0
    %v1021 = vadd.f32 %v980, %v1020
    %1022 = vdwg.mxu0
    %v1023 = vadd.f32 %v916, %v1019
    %v1024 = vadd.f32 %v917, %v1021
    %v1025 = vsel %vm141, %v1023, 0.0
    %1026 = vadd.xlane.f32.xlu0 %v1025
    %v1027 = vpop.xlane.xlu0 %1026
    %v1028 = vsel %vm141, %v1024, 0.0
    %1029 = vadd.xlane.f32.xlu0 %v1028
    %v1030 = vpop.xlane.xlu0 %1029
    %v1031 = vmul.f32 %v1027, %v154
    %v1032 = vmul.f32 %v1030, %v154
    %v1033 = vsub.f32 %v1023, %v1031
    %v1034 = vsub.f32 %v1024, %v1032
    %v1035 = vmul.f32 %v1033, %v1033
    %v1036 = vmul.f32 %v1034, %v1034
    %v1037 = vsel %vm141, %v1035, 0.0
    %1038 = vadd.xlane.f32.xlu0 %v1037
    %v1039 = vpop.xlane.xlu0 %1038
    %v1040 = vsel %vm141, %v1036, 0.0
    %1041 = vadd.xlane.f32.xlu0 %v1040
    %v1042 = vpop.xlane.xlu0 %1041
    %v1043 = vmul.f32 %v1039, %v154
    %v1044 = vmul.f32 %v1042, %v154
    %v1045 = vadd.f32 %v1043, 1e-12
    %v1046 = vadd.f32 %v1044, 1e-12
    %v1047 = vrsqrt.pop %v1045
    %v1048 = vmul.f32 %v1047, %v1045
    %v1049 = vmul.f32 %v1048, %v1047
    %v1050 = vmul.f32 0.5, %v1049
    %v1051 = vsub.f32 1.5, %v1050
    %v1052 = vmul.f32 %v1047, %v1051
    %vm1053 = vweird.f32 %v1045
    %vm1054 = vweird.f32 %v1047
    %vm1055 = vmor %vm1053, %vm1054
    %v1056 = vsel %vm1055, %v1047, %v1052
    %v1057 = vrsqrt.pop %v1046
    %v1058 = vmul.f32 %v1057, %v1046
    %v1059 = vmul.f32 %v1058, %v1057
    %v1060 = vmul.f32 0.5, %v1059
    %v1061 = vsub.f32 1.5, %v1060
    %v1062 = vmul.f32 %v1057, %v1061
    %vm1063 = vweird.f32 %v1046
    %vm1064 = vweird.f32 %v1057
    %vm1065 = vmor %vm1063, %vm1064
    %v1066 = vsel %vm1065, %v1057, %v1062
    %v1067 = vmul.f32 %v1033, %v1056
    %v1068 = vmul.f32 %v1034, %v1066
    %v1069 = vperm.slane %v44, 0
    %v1070 = vmul.f32 %v1067, %v1069
    %v1071 = vmul.f32 %v1068, %v1069
    %v1072 = vperm.slane %v44, 1
    %v1073 = vadd.f32 %v1070, %v1072
    %v1074 = vadd.f32 %v1071, %v1072
    %s1075 = scalar_lea.vmem %s7, 16
    %v1076 = vld [vmem:[%s1075] sm:$0xf]
    %v1077 = vld [vmem:[%s1075 + $0x4] sm:$0xf]
    %v1078 = vld [vmem:[%s1075 + $0x8] sm:$0xf]
    %v1079 = vld [vmem:[%s1075 + $0xc] sm:$0xf]
    %v1080 = vpack.c.bf16 %v1074, %v1073
    %v1081 = vperm.slane %v44, 2
    %v1086 = vunpack.c.l.b16 %v1076
    %v1087 = vunpack.c.l.b16 %v1077
    %v1088 = vunpack.c.l.b16 %v1078
    %v1089 = vunpack.c.l.b16 %v1079
    %v1090 = vpack.c.b16 %v1087, %v1086
    %v1091 = vpack.c.b16 %v1089, %v1088
    %v1095 = vsel %vm141, %v1080, 0
    %1097 = vmatpush.bf16.msra.mxu0 0
    %1098 = vmatpush.bf16.msra.mxu0 0
    %1099 = vmatpush.bf16.msra.mxu0 0
    %1100 = vmatpush.bf16.msra.mxu0 0
    %1101 = vmatpush.bf16.msra.mxu0 0
    %1102 = vmatpush.bf16.msra.mxu0 0
    %1103 = vmatpush.bf16.msra.mxu0 %v1091
    %1104 = vmatpush.bf16.msra.mxu0 %v1090
    %1105 = vmatmul.bf16.gmra.mxu0 %v1095
    %v1106 = vpop.f32.mrf.mxu0
    %v1107 = vadd.f32 %v1081, %v1106
    %v1108 = vpop.f32.mrf.mxu0
    %v1109 = vadd.f32 %v1081, %v1108
    %1110 = vdwg.mxu0
    %v1111 = vpack.c.bf16 %v1107, %v1107
    %v1112 = vpack.c.bf16 %v1109, %v1109
    %v1114 = vunpack.c.l.b16 %v1111
    %v1115 = vpack.c.b16 %v1114, %v1114
    %1116 = vrot.lane.b32.xlu0 %v1115, 96
    %v1117 = vpop.permute.xlu0 %1116
    %v1119 = vsel %vm248, %v1111, 0
    %v1122 = vsel %vm248, %v1117, 0
    %1124 = vmatpush.bf16.xpose.msra.mxu0 0
    %1125 = vmatpush.bf16.xpose.msra.mxu0 0
    %1126 = vmatpush.bf16.xpose.msra.mxu0 0
    %1127 = vmatpush.bf16.xpose.msra.mxu0 0
    %1128 = vmatpush.bf16.xpose.msra.mxu0 0
    %1129 = vmatpush.bf16.xpose.msra.mxu0 0
    %1130 = vmatpush.bf16.xpose.msra.mxu0 0
    %1131 = vmatpush.bf16.xpose.msra.mxu0 %v1122
    %1132 = vmatmul.bf16.gmra.mxu0 %v1119
    %v1133 = vpop.f32.mrf.mxu0
    %v1134 = vadd.f32 %v202, %v1133
    %v1135 = vpop.f32.mrf.mxu0
    %1136 = vdwg.mxu0
    %v1138 = vunpack.c.l.b16 %v1112
    %v1139 = vpack.c.b16 %v1138, %v1138
    %1140 = vrot.lane.b32.xlu0 %v1139, 96
    %v1141 = vpop.permute.xlu0 %1140
    %v1143 = vsel %vm248, %v1112, 0
    %v1146 = vsel %vm248, %v1141, 0
    %1148 = vmatpush.bf16.xpose.msra.mxu0 0
    %1149 = vmatpush.bf16.xpose.msra.mxu0 0
    %1150 = vmatpush.bf16.xpose.msra.mxu0 0
    %1151 = vmatpush.bf16.xpose.msra.mxu0 0
    %1152 = vmatpush.bf16.xpose.msra.mxu0 0
    %1153 = vmatpush.bf16.xpose.msra.mxu0 0
    %1154 = vmatpush.bf16.xpose.msra.mxu0 0
    %1155 = vmatpush.bf16.xpose.msra.mxu0 %v1146
    %1156 = vmatmul.bf16.gmra.mxu0 %v1143
    %v1157 = vpop.f32.mrf.mxu0
    %v1158 = vadd.f32 %v203, %v1157
    %v1159 = vpop.f32.mrf.mxu0
    %1160 = vdwg.mxu0
    %v1161 = vsel %vm248, %v1134, -inf
    %1162 = vmax.xlane.f32.xlu0 %v1161
    %v1163 = vpop.xlane.xlu0 %1162
    %v1164 = vsel %vm248, %v1158, -inf
    %1165 = vmax.xlane.f32.xlu0 %v1164
    %v1166 = vpop.xlane.xlu0 %1165
    %v1167 = vsub.f32 %v1134, %v1163
    %v1168 = vsub.f32 %v1158, %v1166
    %v1169 = vmul.f32 %v1167, 1.442695
    %v1170 = vpow.pop %v1169
    %v1171 = vmul.f32 %v1168, 1.442695
    %v1172 = vpow.pop %v1171
    %v1173 = vsel %vm248, %v1170, 0.0
    %1174 = vadd.xlane.f32.xlu0 %v1173
    %v1175 = vpop.xlane.xlu0 %1174
    %v1176 = vsel %vm248, %v1172, 0.0
    %1177 = vadd.xlane.f32.xlu0 %v1176
    %v1178 = vpop.xlane.xlu0 %1177
    %v1179 = vrcp.pop %v1175
    %v1180 = vmul.f32 %v1175, %v1179
    %v1181 = vsub.f32 1.0, %v1180
    %v1182 = vmul.f32 %v1179, %v1181
    %v1183 = vadd.f32 %v1179, %v1182
    %vm1184 = vweird.f32 %v1175
    %vm1185 = vweird.f32 %v1179
    %vm1186 = vmor %vm1184, %vm1185
    %v1187 = vsel %vm1186, %v1179, %v1183
    %v1188 = vand.u32 2147483647, %v1175
    %vm1189 = vcmp.eq.f32.partialorder %v1188, 8.507059e+37
    %v1190 = vand.u32 %v1175, 2147483648
    %v1191 = vor.u32 1.1754944e-38, %v1190
    %v1192 = vsel %vm1189, %v1191, %v1187
    %v1193 = vmul.f32 %v1170, %v1192
    %v1194 = vrcp.pop %v1178
    %v1195 = vmul.f32 %v1178, %v1194
    %v1196 = vsub.f32 1.0, %v1195
    %v1197 = vmul.f32 %v1194, %v1196
    %v1198 = vadd.f32 %v1194, %v1197
    %vm1199 = vweird.f32 %v1178
    %vm1200 = vweird.f32 %v1194
    %vm1201 = vmor %vm1199, %vm1200
    %v1202 = vsel %vm1201, %v1194, %v1198
    %v1203 = vand.u32 2147483647, %v1178
    %vm1204 = vcmp.eq.f32.partialorder %v1203, 8.507059e+37
    %v1205 = vand.u32 %v1178, 2147483648
    %v1206 = vor.u32 1.1754944e-38, %v1205
    %v1207 = vsel %vm1204, %v1206, %v1202
    %v1208 = vmul.f32 %v1172, %v1207
    %v1209 = vpack.c.bf16 %v1193, %v1193
    %v1210 = vpack.c.bf16 %v1208, %v1208
    %1211 = vrot.lane.b32.xlu0 %v1115, 64
    %v1212 = vpop.permute.xlu0 %1211
    %v1214 = vsel %vm248, %v1209, 0
    %v1217 = vsel %vm347, %v1212, 0
    %1219 = vmatpush.bf16.msra.mxu0 0
    %1220 = vmatpush.bf16.msra.mxu0 0
    %1221 = vmatpush.bf16.msra.mxu0 0
    %1222 = vmatpush.bf16.msra.mxu0 0
    %1223 = vmatpush.bf16.msra.mxu0 0
    %1224 = vmatpush.bf16.msra.mxu0 0
    %1225 = vmatpush.bf16.msra.mxu0 0
    %1226 = vmatpush.bf16.msra.mxu0 %v1217
    %1227 = vmatmul.bf16.gmra.mxu0 %v1214
    %v1228 = vpop.f32.mrf.mxu0
    %v1229 = vadd.f32 0.0, %v1228
    %v1230 = vpop.f32.mrf.mxu0
    %1231 = vdwg.mxu0
    %1232 = vrot.lane.b32.xlu0 %v1139, 64
    %v1233 = vpop.permute.xlu0 %1232
    %v1235 = vsel %vm248, %v1210, 0
    %v1238 = vsel %vm347, %v1233, 0
    %1240 = vmatpush.bf16.msra.mxu0 0
    %1241 = vmatpush.bf16.msra.mxu0 0
    %1242 = vmatpush.bf16.msra.mxu0 0
    %1243 = vmatpush.bf16.msra.mxu0 0
    %1244 = vmatpush.bf16.msra.mxu0 0
    %1245 = vmatpush.bf16.msra.mxu0 0
    %1246 = vmatpush.bf16.msra.mxu0 0
    %1247 = vmatpush.bf16.msra.mxu0 %v1238
    %1248 = vmatmul.bf16.gmra.mxu0 %v1235
    %v1249 = vpop.f32.mrf.mxu0
    %v1250 = vadd.f32 0.0, %v1249
    %v1251 = vpop.f32.mrf.mxu0
    %1252 = vdwg.mxu0
    %1253 = vrot.lane.b32.xlu0 %v1115, 120
    %v1254 = vpop.permute.xlu0 %1253
    %1255 = vrot.lane.b32.xlu0 %v1115, 88
    %v1256 = vpop.permute.xlu0 %1255
    %v1258 = vsel %vm248, %v1254, 0
    %v1261 = vsel %vm248, %v1256, 0
    %1263 = vmatpush.bf16.xpose.msra.mxu0 0
    %1264 = vmatpush.bf16.xpose.msra.mxu0 0
    %1265 = vmatpush.bf16.xpose.msra.mxu0 0
    %1266 = vmatpush.bf16.xpose.msra.mxu0 0
    %1267 = vmatpush.bf16.xpose.msra.mxu0 0
    %1268 = vmatpush.bf16.xpose.msra.mxu0 0
    %1269 = vmatpush.bf16.xpose.msra.mxu0 0
    %1270 = vmatpush.bf16.xpose.msra.mxu0 %v1261
    %1271 = vmatmul.bf16.gmra.mxu0 %v1258
    %v1272 = vpop.f32.mrf.mxu0
    %v1273 = vadd.f32 %v202, %v1272
    %v1274 = vpop.f32.mrf.mxu0
    %1275 = vdwg.mxu0
    %1276 = vrot.lane.b32.xlu0 %v1139, 120
    %v1277 = vpop.permute.xlu0 %1276
    %1278 = vrot.lane.b32.xlu0 %v1139, 88
    %v1279 = vpop.permute.xlu0 %1278
    %v1281 = vsel %vm248, %v1277, 0
    %v1284 = vsel %vm248, %v1279, 0
    %1286 = vmatpush.bf16.xpose.msra.mxu0 0
    %1287 = vmatpush.bf16.xpose.msra.mxu0 0
    %1288 = vmatpush.bf16.xpose.msra.mxu0 0
    %1289 = vmatpush.bf16.xpose.msra.mxu0 0
    %1290 = vmatpush.bf16.xpose.msra.mxu0 0
    %1291 = vmatpush.bf16.xpose.msra.mxu0 0
    %1292 = vmatpush.bf16.xpose.msra.mxu0 0
    %1293 = vmatpush.bf16.xpose.msra.mxu0 %v1284
    %1294 = vmatmul.bf16.gmra.mxu0 %v1281
    %v1295 = vpop.f32.mrf.mxu0
    %v1296 = vadd.f32 %v203, %v1295
    %v1297 = vpop.f32.mrf.mxu0
    %1298 = vdwg.mxu0
    %v1299 = vsel %vm248, %v1273, -inf
    %1300 = vmax.xlane.f32.xlu0 %v1299
    %v1301 = vpop.xlane.xlu0 %1300
    %v1302 = vsel %vm248, %v1296, -inf
    %1303 = vmax.xlane.f32.xlu0 %v1302
    %v1304 = vpop.xlane.xlu0 %1303
    %v1305 = vsub.f32 %v1273, %v1301
    %v1306 = vsub.f32 %v1296, %v1304
    %v1307 = vmul.f32 %v1305, 1.442695
    %v1308 = vpow.pop %v1307
    %v1309 = vmul.f32 %v1306, 1.442695
    %v1310 = vpow.pop %v1309
    %v1311 = vsel %vm248, %v1308, 0.0
    %1312 = vadd.xlane.f32.xlu0 %v1311
    %v1313 = vpop.xlane.xlu0 %1312
    %v1314 = vsel %vm248, %v1310, 0.0
    %1315 = vadd.xlane.f32.xlu0 %v1314
    %v1316 = vpop.xlane.xlu0 %1315
    %v1317 = vrcp.pop %v1313
    %v1318 = vmul.f32 %v1313, %v1317
    %v1319 = vsub.f32 1.0, %v1318
    %v1320 = vmul.f32 %v1317, %v1319
    %v1321 = vadd.f32 %v1317, %v1320
    %vm1322 = vweird.f32 %v1313
    %vm1323 = vweird.f32 %v1317
    %vm1324 = vmor %vm1322, %vm1323
    %v1325 = vsel %vm1324, %v1317, %v1321
    %v1326 = vand.u32 2147483647, %v1313
    %vm1327 = vcmp.eq.f32.partialorder %v1326, 8.507059e+37
    %v1328 = vand.u32 %v1313, 2147483648
    %v1329 = vor.u32 1.1754944e-38, %v1328
    %v1330 = vsel %vm1327, %v1329, %v1325
    %v1331 = vmul.f32 %v1308, %v1330
    %v1332 = vrcp.pop %v1316
    %v1333 = vmul.f32 %v1316, %v1332
    %v1334 = vsub.f32 1.0, %v1333
    %v1335 = vmul.f32 %v1332, %v1334
    %v1336 = vadd.f32 %v1332, %v1335
    %vm1337 = vweird.f32 %v1316
    %vm1338 = vweird.f32 %v1332
    %vm1339 = vmor %vm1337, %vm1338
    %v1340 = vsel %vm1339, %v1332, %v1336
    %v1341 = vand.u32 2147483647, %v1316
    %vm1342 = vcmp.eq.f32.partialorder %v1341, 8.507059e+37
    %v1343 = vand.u32 %v1316, 2147483648
    %v1344 = vor.u32 1.1754944e-38, %v1343
    %v1345 = vsel %vm1342, %v1344, %v1340
    %v1346 = vmul.f32 %v1310, %v1345
    %v1347 = vpack.c.bf16 %v1331, %v1331
    %v1348 = vpack.c.bf16 %v1346, %v1346
    %1349 = vrot.lane.b32.xlu0 %v1115, 56
    %v1350 = vpop.permute.xlu0 %1349
    %v1352 = vsel %vm248, %v1347, 0
    %v1355 = vsel %vm347, %v1350, 0
    %1357 = vmatpush.bf16.msra.mxu0 0
    %1358 = vmatpush.bf16.msra.mxu0 0
    %1359 = vmatpush.bf16.msra.mxu0 0
    %1360 = vmatpush.bf16.msra.mxu0 0
    %1361 = vmatpush.bf16.msra.mxu0 0
    %1362 = vmatpush.bf16.msra.mxu0 0
    %1363 = vmatpush.bf16.msra.mxu0 0
    %1364 = vmatpush.bf16.msra.mxu0 %v1355
    %1365 = vmatmul.bf16.gmra.mxu0 %v1352
    %v1366 = vpop.f32.mrf.mxu0
    %v1367 = vadd.f32 0.0, %v1366
    %v1368 = vpop.f32.mrf.mxu0
    %1369 = vdwg.mxu0
    %1370 = vrot.lane.b32.xlu0 %v1139, 56
    %v1371 = vpop.permute.xlu0 %1370
    %v1373 = vsel %vm248, %v1348, 0
    %v1376 = vsel %vm347, %v1371, 0
    %1378 = vmatpush.bf16.msra.mxu0 0
    %1379 = vmatpush.bf16.msra.mxu0 0
    %1380 = vmatpush.bf16.msra.mxu0 0
    %1381 = vmatpush.bf16.msra.mxu0 0
    %1382 = vmatpush.bf16.msra.mxu0 0
    %1383 = vmatpush.bf16.msra.mxu0 0
    %1384 = vmatpush.bf16.msra.mxu0 0
    %1385 = vmatpush.bf16.msra.mxu0 %v1376
    %1386 = vmatmul.bf16.gmra.mxu0 %v1373
    %v1387 = vpop.f32.mrf.mxu0
    %v1388 = vadd.f32 0.0, %v1387
    %v1389 = vpop.f32.mrf.mxu0
    %1390 = vdwg.mxu0
    %1391 = vrot.lane.b32.xlu0 %v1115, 112
    %v1392 = vpop.permute.xlu0 %1391
    %1393 = vrot.lane.b32.xlu0 %v1115, 80
    %v1394 = vpop.permute.xlu0 %1393
    %v1396 = vsel %vm248, %v1392, 0
    %v1399 = vsel %vm248, %v1394, 0
    %1401 = vmatpush.bf16.xpose.msra.mxu0 0
    %1402 = vmatpush.bf16.xpose.msra.mxu0 0
    %1403 = vmatpush.bf16.xpose.msra.mxu0 0
    %1404 = vmatpush.bf16.xpose.msra.mxu0 0
    %1405 = vmatpush.bf16.xpose.msra.mxu0 0
    %1406 = vmatpush.bf16.xpose.msra.mxu0 0
    %1407 = vmatpush.bf16.xpose.msra.mxu0 0
    %1408 = vmatpush.bf16.xpose.msra.mxu0 %v1399
    %1409 = vmatmul.bf16.gmra.mxu0 %v1396
    %v1410 = vpop.f32.mrf.mxu0
    %v1411 = vadd.f32 %v202, %v1410
    %v1412 = vpop.f32.mrf.mxu0
    %1413 = vdwg.mxu0
    %1414 = vrot.lane.b32.xlu0 %v1139, 112
    %v1415 = vpop.permute.xlu0 %1414
    %1416 = vrot.lane.b32.xlu0 %v1139, 80
    %v1417 = vpop.permute.xlu0 %1416
    %v1419 = vsel %vm248, %v1415, 0
    %v1422 = vsel %vm248, %v1417, 0
    %1424 = vmatpush.bf16.xpose.msra.mxu0 0
    %1425 = vmatpush.bf16.xpose.msra.mxu0 0
    %1426 = vmatpush.bf16.xpose.msra.mxu0 0
    %1427 = vmatpush.bf16.xpose.msra.mxu0 0
    %1428 = vmatpush.bf16.xpose.msra.mxu0 0
    %1429 = vmatpush.bf16.xpose.msra.mxu0 0
    %1430 = vmatpush.bf16.xpose.msra.mxu0 0
    %1431 = vmatpush.bf16.xpose.msra.mxu0 %v1422
    %1432 = vmatmul.bf16.gmra.mxu0 %v1419
    %v1433 = vpop.f32.mrf.mxu0
    %v1434 = vadd.f32 %v203, %v1433
    %v1435 = vpop.f32.mrf.mxu0
    %1436 = vdwg.mxu0
    %v1437 = vsel %vm248, %v1411, -inf
    %1438 = vmax.xlane.f32.xlu0 %v1437
    %v1439 = vpop.xlane.xlu0 %1438
    %v1440 = vsel %vm248, %v1434, -inf
    %1441 = vmax.xlane.f32.xlu0 %v1440
    %v1442 = vpop.xlane.xlu0 %1441
    %v1443 = vsub.f32 %v1411, %v1439
    %v1444 = vsub.f32 %v1434, %v1442
    %v1445 = vmul.f32 %v1443, 1.442695
    %v1446 = vpow.pop %v1445
    %v1447 = vmul.f32 %v1444, 1.442695
    %v1448 = vpow.pop %v1447
    %v1449 = vsel %vm248, %v1446, 0.0
    %1450 = vadd.xlane.f32.xlu0 %v1449
    %v1451 = vpop.xlane.xlu0 %1450
    %v1452 = vsel %vm248, %v1448, 0.0
    %1453 = vadd.xlane.f32.xlu0 %v1452
    %v1454 = vpop.xlane.xlu0 %1453
    %v1455 = vrcp.pop %v1451
    %v1456 = vmul.f32 %v1451, %v1455
    %v1457 = vsub.f32 1.0, %v1456
    %v1458 = vmul.f32 %v1455, %v1457
    %v1459 = vadd.f32 %v1455, %v1458
    %vm1460 = vweird.f32 %v1451
    %vm1461 = vweird.f32 %v1455
    %vm1462 = vmor %vm1460, %vm1461
    %v1463 = vsel %vm1462, %v1455, %v1459
    %v1464 = vand.u32 2147483647, %v1451
    %vm1465 = vcmp.eq.f32.partialorder %v1464, 8.507059e+37
    %v1466 = vand.u32 %v1451, 2147483648
    %v1467 = vor.u32 1.1754944e-38, %v1466
    %v1468 = vsel %vm1465, %v1467, %v1463
    %v1469 = vmul.f32 %v1446, %v1468
    %v1470 = vrcp.pop %v1454
    %v1471 = vmul.f32 %v1454, %v1470
    %v1472 = vsub.f32 1.0, %v1471
    %v1473 = vmul.f32 %v1470, %v1472
    %v1474 = vadd.f32 %v1470, %v1473
    %vm1475 = vweird.f32 %v1454
    %vm1476 = vweird.f32 %v1470
    %vm1477 = vmor %vm1475, %vm1476
    %v1478 = vsel %vm1477, %v1470, %v1474
    %v1479 = vand.u32 2147483647, %v1454
    %vm1480 = vcmp.eq.f32.partialorder %v1479, 8.507059e+37
    %v1481 = vand.u32 %v1454, 2147483648
    %v1482 = vor.u32 1.1754944e-38, %v1481
    %v1483 = vsel %vm1480, %v1482, %v1478
    %v1484 = vmul.f32 %v1448, %v1483
    %v1485 = vpack.c.bf16 %v1469, %v1469
    %v1486 = vpack.c.bf16 %v1484, %v1484
    %1487 = vrot.lane.b32.xlu0 %v1115, 48
    %v1488 = vpop.permute.xlu0 %1487
    %v1490 = vsel %vm248, %v1485, 0
    %v1493 = vsel %vm347, %v1488, 0
    %1495 = vmatpush.bf16.msra.mxu0 0
    %1496 = vmatpush.bf16.msra.mxu0 0
    %1497 = vmatpush.bf16.msra.mxu0 0
    %1498 = vmatpush.bf16.msra.mxu0 0
    %1499 = vmatpush.bf16.msra.mxu0 0
    %1500 = vmatpush.bf16.msra.mxu0 0
    %1501 = vmatpush.bf16.msra.mxu0 0
    %1502 = vmatpush.bf16.msra.mxu0 %v1493
    %1503 = vmatmul.bf16.gmra.mxu0 %v1490
    %v1504 = vpop.f32.mrf.mxu0
    %v1505 = vadd.f32 0.0, %v1504
    %v1506 = vpop.f32.mrf.mxu0
    %1507 = vdwg.mxu0
    %1508 = vrot.lane.b32.xlu0 %v1139, 48
    %v1509 = vpop.permute.xlu0 %1508
    %v1511 = vsel %vm248, %v1486, 0
    %v1514 = vsel %vm347, %v1509, 0
    %1516 = vmatpush.bf16.msra.mxu0 0
    %1517 = vmatpush.bf16.msra.mxu0 0
    %1518 = vmatpush.bf16.msra.mxu0 0
    %1519 = vmatpush.bf16.msra.mxu0 0
    %1520 = vmatpush.bf16.msra.mxu0 0
    %1521 = vmatpush.bf16.msra.mxu0 0
    %1522 = vmatpush.bf16.msra.mxu0 0
    %1523 = vmatpush.bf16.msra.mxu0 %v1514
    %1524 = vmatmul.bf16.gmra.mxu0 %v1511
    %v1525 = vpop.f32.mrf.mxu0
    %v1526 = vadd.f32 0.0, %v1525
    %v1527 = vpop.f32.mrf.mxu0
    %1528 = vdwg.mxu0
    %1529 = vrot.lane.b32.xlu0 %v1115, 104
    %v1530 = vpop.permute.xlu0 %1529
    %1531 = vrot.lane.b32.xlu0 %v1115, 72
    %v1532 = vpop.permute.xlu0 %1531
    %v1534 = vsel %vm248, %v1530, 0
    %v1537 = vsel %vm248, %v1532, 0
    %1539 = vmatpush.bf16.xpose.msra.mxu0 0
    %1540 = vmatpush.bf16.xpose.msra.mxu0 0
    %1541 = vmatpush.bf16.xpose.msra.mxu0 0
    %1542 = vmatpush.bf16.xpose.msra.mxu0 0
    %1543 = vmatpush.bf16.xpose.msra.mxu0 0
    %1544 = vmatpush.bf16.xpose.msra.mxu0 0
    %1545 = vmatpush.bf16.xpose.msra.mxu0 0
    %1546 = vmatpush.bf16.xpose.msra.mxu0 %v1537
    %1547 = vmatmul.bf16.gmra.mxu0 %v1534
    %v1548 = vpop.f32.mrf.mxu0
    %v1549 = vadd.f32 %v202, %v1548
    %v1550 = vpop.f32.mrf.mxu0
    %1551 = vdwg.mxu0
    %1552 = vrot.lane.b32.xlu0 %v1139, 104
    %v1553 = vpop.permute.xlu0 %1552
    %1554 = vrot.lane.b32.xlu0 %v1139, 72
    %v1555 = vpop.permute.xlu0 %1554
    %v1557 = vsel %vm248, %v1553, 0
    %v1560 = vsel %vm248, %v1555, 0
    %1562 = vmatpush.bf16.xpose.msra.mxu0 0
    %1563 = vmatpush.bf16.xpose.msra.mxu0 0
    %1564 = vmatpush.bf16.xpose.msra.mxu0 0
    %1565 = vmatpush.bf16.xpose.msra.mxu0 0
    %1566 = vmatpush.bf16.xpose.msra.mxu0 0
    %1567 = vmatpush.bf16.xpose.msra.mxu0 0
    %1568 = vmatpush.bf16.xpose.msra.mxu0 0
    %1569 = vmatpush.bf16.xpose.msra.mxu0 %v1560
    %1570 = vmatmul.bf16.gmra.mxu0 %v1557
    %v1571 = vpop.f32.mrf.mxu0
    %v1572 = vadd.f32 %v203, %v1571
    %v1573 = vpop.f32.mrf.mxu0
    %1574 = vdwg.mxu0
    %v1575 = vsel %vm248, %v1549, -inf
    %1576 = vmax.xlane.f32.xlu0 %v1575
    %v1577 = vpop.xlane.xlu0 %1576
    %v1578 = vsel %vm248, %v1572, -inf
    %1579 = vmax.xlane.f32.xlu0 %v1578
    %v1580 = vpop.xlane.xlu0 %1579
    %v1581 = vsub.f32 %v1549, %v1577
    %v1582 = vsub.f32 %v1572, %v1580
    %v1583 = vmul.f32 %v1581, 1.442695
    %v1584 = vpow.pop %v1583
    %v1585 = vmul.f32 %v1582, 1.442695
    %v1586 = vpow.pop %v1585
    %v1587 = vsel %vm248, %v1584, 0.0
    %1588 = vadd.xlane.f32.xlu0 %v1587
    %v1589 = vpop.xlane.xlu0 %1588
    %v1590 = vsel %vm248, %v1586, 0.0
    %1591 = vadd.xlane.f32.xlu0 %v1590
    %v1592 = vpop.xlane.xlu0 %1591
    %v1593 = vrcp.pop %v1589
    %v1594 = vmul.f32 %v1589, %v1593
    %v1595 = vsub.f32 1.0, %v1594
    %v1596 = vmul.f32 %v1593, %v1595
    %v1597 = vadd.f32 %v1593, %v1596
    %vm1598 = vweird.f32 %v1589
    %vm1599 = vweird.f32 %v1593
    %vm1600 = vmor %vm1598, %vm1599
    %v1601 = vsel %vm1600, %v1593, %v1597
    %v1602 = vand.u32 2147483647, %v1589
    %vm1603 = vcmp.eq.f32.partialorder %v1602, 8.507059e+37
    %v1604 = vand.u32 %v1589, 2147483648
    %v1605 = vor.u32 1.1754944e-38, %v1604
    %v1606 = vsel %vm1603, %v1605, %v1601
    %v1607 = vmul.f32 %v1584, %v1606
    %v1608 = vrcp.pop %v1592
    %v1609 = vmul.f32 %v1592, %v1608
    %v1610 = vsub.f32 1.0, %v1609
    %v1611 = vmul.f32 %v1608, %v1610
    %v1612 = vadd.f32 %v1608, %v1611
    %vm1613 = vweird.f32 %v1592
    %vm1614 = vweird.f32 %v1608
    %vm1615 = vmor %vm1613, %vm1614
    %v1616 = vsel %vm1615, %v1608, %v1612
    %v1617 = vand.u32 2147483647, %v1592
    %vm1618 = vcmp.eq.f32.partialorder %v1617, 8.507059e+37
    %v1619 = vand.u32 %v1592, 2147483648
    %v1620 = vor.u32 1.1754944e-38, %v1619
    %v1621 = vsel %vm1618, %v1620, %v1616
    %v1622 = vmul.f32 %v1586, %v1621
    %v1623 = vpack.c.bf16 %v1607, %v1607
    %v1624 = vpack.c.bf16 %v1622, %v1622
    %1625 = vrot.lane.b32.xlu0 %v1115, 40
    %v1626 = vpop.permute.xlu0 %1625
    %v1628 = vsel %vm248, %v1623, 0
    %v1631 = vsel %vm347, %v1626, 0
    %1633 = vmatpush.bf16.msra.mxu0 0
    %1634 = vmatpush.bf16.msra.mxu0 0
    %1635 = vmatpush.bf16.msra.mxu0 0
    %1636 = vmatpush.bf16.msra.mxu0 0
    %1637 = vmatpush.bf16.msra.mxu0 0
    %1638 = vmatpush.bf16.msra.mxu0 0
    %1639 = vmatpush.bf16.msra.mxu0 0
    %1640 = vmatpush.bf16.msra.mxu0 %v1631
    %1641 = vmatmul.bf16.gmra.mxu0 %v1628
    %v1642 = vpop.f32.mrf.mxu0
    %v1643 = vadd.f32 0.0, %v1642
    %v1644 = vpop.f32.mrf.mxu0
    %1645 = vdwg.mxu0
    %1646 = vrot.lane.b32.xlu0 %v1139, 40
    %v1647 = vpop.permute.xlu0 %1646
    %v1649 = vsel %vm248, %v1624, 0
    %v1652 = vsel %vm347, %v1647, 0
    %1654 = vmatpush.bf16.msra.mxu0 0
    %1655 = vmatpush.bf16.msra.mxu0 0
    %1656 = vmatpush.bf16.msra.mxu0 0
    %1657 = vmatpush.bf16.msra.mxu0 0
    %1658 = vmatpush.bf16.msra.mxu0 0
    %1659 = vmatpush.bf16.msra.mxu0 0
    %1660 = vmatpush.bf16.msra.mxu0 0
    %1661 = vmatpush.bf16.msra.mxu0 %v1652
    %1662 = vmatmul.bf16.gmra.mxu0 %v1649
    %v1663 = vpop.f32.mrf.mxu0
    %v1664 = vadd.f32 0.0, %v1663
    %v1665 = vpop.f32.mrf.mxu0
    %1666 = vdwg.mxu0
    %1669 = vrot.lane.b32.xlu0 %v1367, 8
    %v1670 = vpop.permute.xlu0 %1669
    %1671 = vrot.lane.b32.xlu0 %v1388, 8
    %v1672 = vpop.permute.xlu0 %1671
    %1677 = vrot.lane.b32.xlu0 %v1505, 16
    %v1678 = vpop.permute.xlu0 %1677
    %1679 = vrot.lane.b32.xlu0 %v1526, 16
    %v1680 = vpop.permute.xlu0 %1679
    %1685 = vrot.lane.b32.xlu0 %v1643, 24
    %v1686 = vpop.permute.xlu0 %1685
    %1687 = vrot.lane.b32.xlu0 %v1664, 24
    %v1688 = vpop.permute.xlu0 %1687
    %v1691 = vsel %vm248, %v1229, %v1670
    %v1692 = vsel %vm248, %v1250, %v1672
    %v1693 = vsel %vm825, %v1691, %v1678
    %v1694 = vsel %vm825, %v1692, %v1680
    %v1695 = vsel %vm828, %v1693, %v1686
    %v1696 = vsel %vm828, %v1694, %v1688
    %s1697 = scalar_lea.vmem %s8, 16
    %v1698 = vld [vmem:[%s1697] sm:$0xf]
    %v1699 = vld [vmem:[%s1697 + $0x4] sm:$0xf]
    %v1700 = vld [vmem:[%s1697 + $0x8] sm:$0xf]
    %v1701 = vld [vmem:[%s1697 + $0xc] sm:$0xf]
    %v1702 = vpack.c.bf16 %v1696, %v1695
    %v1703 = vperm.slane %v44, 3
    %v1708 = vunpack.c.l.b16 %v1698
    %v1709 = vunpack.c.l.b16 %v1699
    %v1710 = vunpack.c.l.b16 %v1700
    %v1711 = vunpack.c.l.b16 %v1701
    %v1712 = vpack.c.b16 %v1709, %v1708
    %v1713 = vpack.c.b16 %v1711, %v1710
    %v1717 = vsel %vm141, %v1702, 0
    %1719 = vmatpush.bf16.msra.mxu0 0
    %1720 = vmatpush.bf16.msra.mxu0 0
    %1721 = vmatpush.bf16.msra.mxu0 0
    %1722 = vmatpush.bf16.msra.mxu0 0
    %1723 = vmatpush.bf16.msra.mxu0 0
    %1724 = vmatpush.bf16.msra.mxu0 0
    %1725 = vmatpush.bf16.msra.mxu0 %v1713
    %1726 = vmatpush.bf16.msra.mxu0 %v1712
    %1727 = vmatmul.bf16.gmra.mxu0 %v1717
    %v1728 = vpop.f32.mrf.mxu0
    %v1729 = vadd.f32 %v1703, %v1728
    %v1730 = vpop.f32.mrf.mxu0
    %v1731 = vadd.f32 %v1703, %v1730
    %1732 = vdwg.mxu0
    %v1733 = vadd.f32 %v1073, %v1729
    %v1734 = vadd.f32 %v1074, %v1731
    %v1735 = vsel %vm141, %v1733, 0.0
    %1736 = vadd.xlane.f32.xlu0 %v1735
    %v1737 = vpop.xlane.xlu0 %1736
    %v1738 = vsel %vm141, %v1734, 0.0
    %1739 = vadd.xlane.f32.xlu0 %v1738
    %v1740 = vpop.xlane.xlu0 %1739
    %v1741 = vmul.f32 %v1737, %v154
    %v1742 = vmul.f32 %v1740, %v154
    %v1743 = vsub.f32 %v1733, %v1741
    %v1744 = vsub.f32 %v1734, %v1742
    %v1745 = vmul.f32 %v1743, %v1743
    %v1746 = vmul.f32 %v1744, %v1744
    %v1747 = vsel %vm141, %v1745, 0.0
    %1748 = vadd.xlane.f32.xlu0 %v1747
    %v1749 = vpop.xlane.xlu0 %1748
    %v1750 = vsel %vm141, %v1746, 0.0
    %1751 = vadd.xlane.f32.xlu0 %v1750
    %v1752 = vpop.xlane.xlu0 %1751
    %v1753 = vmul.f32 %v1749, %v154
    %v1754 = vmul.f32 %v1752, %v154
    %v1755 = vadd.f32 %v1753, 1e-12
    %v1756 = vadd.f32 %v1754, 1e-12
    %v1757 = vrsqrt.pop %v1755
    %v1758 = vmul.f32 %v1757, %v1755
    %v1759 = vmul.f32 %v1758, %v1757
    %v1760 = vmul.f32 0.5, %v1759
    %v1761 = vsub.f32 1.5, %v1760
    %v1762 = vmul.f32 %v1757, %v1761
    %vm1763 = vweird.f32 %v1755
    %vm1764 = vweird.f32 %v1757
    %vm1765 = vmor %vm1763, %vm1764
    %v1766 = vsel %vm1765, %v1757, %v1762
    %v1767 = vrsqrt.pop %v1756
    %v1768 = vmul.f32 %v1767, %v1756
    %v1769 = vmul.f32 %v1768, %v1767
    %v1770 = vmul.f32 0.5, %v1769
    %v1771 = vsub.f32 1.5, %v1770
    %v1772 = vmul.f32 %v1767, %v1771
    %vm1773 = vweird.f32 %v1756
    %vm1774 = vweird.f32 %v1767
    %vm1775 = vmor %vm1773, %vm1774
    %v1776 = vsel %vm1775, %v1767, %v1772
    %v1777 = vmul.f32 %v1743, %v1766
    %v1778 = vmul.f32 %v1744, %v1776
    %v1779 = vperm.slane %v44, 4
    %v1780 = vmul.f32 %v1777, %v1779
    %v1781 = vmul.f32 %v1778, %v1779
    %v1782 = vperm.slane %v44, 5
    %v1783 = vadd.f32 %v1780, %v1782
    %v1784 = vadd.f32 %v1781, %v1782
    %s1785 = scalar_lea.vmem %s9, 16
    %v1786 = vld [vmem:[%s1785] sm:$0xf]
    %v1787 = vld [vmem:[%s1785 + $0x4] sm:$0xf]
    %v1788 = vld [vmem:[%s1785 + $0x8] sm:$0xf]
    %v1789 = vld [vmem:[%s1785 + $0xc] sm:$0xf]
    %v1790 = vpack.c.bf16 %v1784, %v1783
    %v1791 = vperm.slane %v44, 6
    %v1796 = vunpack.c.l.b16 %v1786
    %v1797 = vunpack.c.l.b16 %v1787
    %v1798 = vunpack.c.l.b16 %v1788
    %v1799 = vunpack.c.l.b16 %v1789
    %v1800 = vpack.c.b16 %v1797, %v1796
    %v1801 = vpack.c.b16 %v1799, %v1798
    %v1805 = vsel %vm141, %v1790, 0
    %1807 = vmatpush.bf16.msra.mxu0 0
    %1808 = vmatpush.bf16.msra.mxu0 0
    %1809 = vmatpush.bf16.msra.mxu0 0
    %1810 = vmatpush.bf16.msra.mxu0 0
    %1811 = vmatpush.bf16.msra.mxu0 0
    %1812 = vmatpush.bf16.msra.mxu0 0
    %1813 = vmatpush.bf16.msra.mxu0 %v1801
    %1814 = vmatpush.bf16.msra.mxu0 %v1800
    %1815 = vmatmul.bf16.gmra.mxu0 %v1805
    %v1816 = vpop.f32.mrf.mxu0
    %v1817 = vadd.f32 %v1791, %v1816
    %v1818 = vpop.f32.mrf.mxu0
    %v1819 = vadd.f32 %v1791, %v1818
    %1820 = vdwg.mxu0
    %v1821 = vmul.f32 %v1817, %v1817
    %v1822 = vmul.f32 %v1819, %v1819
    %v1823 = vmul.f32 %v1817, %v1821
    %v1824 = vmul.f32 %v1819, %v1822
    %v1825 = vmul.f32 %v1823, 0.044715
    %v1826 = vmul.f32 %v1824, 0.044715
    %v1827 = vadd.f32 %v1817, %v1825
    %v1828 = vadd.f32 %v1819, %v1826
    %v1829 = vmul.f32 %v1827, 0.7978846
    %v1830 = vmul.f32 %v1828, 0.7978846
    %v1831 = vtanh.pop %v1829
    %v1832 = vtanh.pop %v1830
    %v1833 = vadd.f32 %v1831, 1.0
    %v1834 = vadd.f32 %v1832, 1.0
    %v1835 = vmul.f32 %v1833, 0.5
    %v1836 = vmul.f32 %v1834, 0.5
    %v1837 = vmul.f32 %v1817, %v1835
    %v1838 = vmul.f32 %v1819, %v1836
    %s1839 = scalar_lea.vmem %s10, 32
    %v1840 = vld [vmem:[%s1839] sm:$0xf]
    %v1841 = vld [vmem:[%s1839 + $0x4] sm:$0xf]
    %v1842 = vld [vmem:[%s1839 + $0x8] sm:$0xf]
    %v1843 = vld [vmem:[%s1839 + $0xc] sm:$0xf]
    %v1844 = vld [vmem:[%s1839 + $0x10] sm:$0xf]
    %v1845 = vld [vmem:[%s1839 + $0x14] sm:$0xf]
    %v1846 = vld [vmem:[%s1839 + $0x18] sm:$0xf]
    %v1847 = vld [vmem:[%s1839 + $0x1c] sm:$0xf]
    %v1848 = vpack.c.bf16 %v1838, %v1837
    %v1849 = vperm.slane %v44, 7
    %v1858 = vunpack.c.l.b16 %v1840
    %v1859 = vunpack.c.l.b16 %v1841
    %v1860 = vunpack.c.l.b16 %v1842
    %v1861 = vunpack.c.l.b16 %v1843
    %v1862 = vunpack.c.l.b16 %v1844
    %v1863 = vunpack.c.l.b16 %v1845
    %v1864 = vunpack.c.l.b16 %v1846
    %v1865 = vunpack.c.l.b16 %v1847
    %v1866 = vpack.c.b16 %v1859, %v1858
    %v1867 = vpack.c.b16 %v1861, %v1860
    %v1868 = vpack.c.b16 %v1863, %v1862
    %v1869 = vpack.c.b16 %v1865, %v1864
    %v1875 = vsel %vm1005, %v1848, 0
    %1877 = vmatpush.bf16.msra.mxu0 0
    %1878 = vmatpush.bf16.msra.mxu0 0
    %1879 = vmatpush.bf16.msra.mxu0 0
    %1880 = vmatpush.bf16.msra.mxu0 0
    %1881 = vmatpush.bf16.msra.mxu0 %v1869
    %1882 = vmatpush.bf16.msra.mxu0 %v1868
    %1883 = vmatpush.bf16.msra.mxu0 %v1867
    %1884 = vmatpush.bf16.msra.mxu0 %v1866
    %1885 = vmatmul.bf16.gmra.mxu0 %v1875
    %v1886 = vpop.f32.mrf.mxu0
    %v1887 = vadd.f32 %v1849, %v1886
    %v1888 = vpop.f32.mrf.mxu0
    %v1889 = vadd.f32 %v1849, %v1888
    %1890 = vdwg.mxu0
    %v1891 = vadd.f32 %v1783, %v1887
    %v1892 = vadd.f32 %v1784, %v1889
    %v1893 = vsel %vm141, %v1891, 0.0
    %1894 = vadd.xlane.f32.xlu0 %v1893
    %v1895 = vpop.xlane.xlu0 %1894
    %v1896 = vsel %vm141, %v1892, 0.0
    %1897 = vadd.xlane.f32.xlu0 %v1896
    %v1898 = vpop.xlane.xlu0 %1897
    %v1899 = vmul.f32 %v1895, %v154
    %v1900 = vmul.f32 %v1898, %v154
    %v1901 = vsub.f32 %v1891, %v1899
    %v1902 = vsub.f32 %v1892, %v1900
    %v1903 = vmul.f32 %v1901, %v1901
    %v1904 = vmul.f32 %v1902, %v1902
    %v1905 = vsel %vm141, %v1903, 0.0
    %1906 = vadd.xlane.f32.xlu0 %v1905
    %v1907 = vpop.xlane.xlu0 %1906
    %v1908 = vsel %vm141, %v1904, 0.0
    %1909 = vadd.xlane.f32.xlu0 %v1908
    %v1910 = vpop.xlane.xlu0 %1909
    %v1911 = vmul.f32 %v1907, %v154
    %v1912 = vmul.f32 %v1910, %v154
    %v1913 = vadd.f32 %v1911, 1e-12
    %v1914 = vadd.f32 %v1912, 1e-12
    %v1915 = vrsqrt.pop %v1913
    %v1916 = vmul.f32 %v1915, %v1913
    %v1917 = vmul.f32 %v1916, %v1915
    %v1918 = vmul.f32 0.5, %v1917
    %v1919 = vsub.f32 1.5, %v1918
    %v1920 = vmul.f32 %v1915, %v1919
    %vm1921 = vweird.f32 %v1913
    %vm1922 = vweird.f32 %v1915
    %vm1923 = vmor %vm1921, %vm1922
    %v1924 = vsel %vm1923, %v1915, %v1920
    %v1925 = vrsqrt.pop %v1914
    %v1926 = vmul.f32 %v1925, %v1914
    %v1927 = vmul.f32 %v1926, %v1925
    %v1928 = vmul.f32 0.5, %v1927
    %v1929 = vsub.f32 1.5, %v1928
    %v1930 = vmul.f32 %v1925, %v1929
    %vm1931 = vweird.f32 %v1914
    %vm1932 = vweird.f32 %v1925
    %vm1933 = vmor %vm1931, %vm1932
    %v1934 = vsel %vm1933, %v1925, %v1930
    %v1935 = vmul.f32 %v1901, %v1924
    %v1936 = vmul.f32 %v1902, %v1934
    %v1937 = vperm.slane %v45, 0
    %v1938 = vmul.f32 %v1935, %v1937
    %v1939 = vmul.f32 %v1936, %v1937
    %v1940 = vperm.slane %v45, 1
    %v1941 = vadd.f32 %v1938, %v1940
    %v1942 = vadd.f32 %v1939, %v1940
    %v1943 = vld [vmem:[%s11] sm:$0xf]
    %v1944 = vld [vmem:[%s11 + $0x4] sm:$0xf]
    %v1945 = vld [vmem:[%s11 + $0x8] sm:$0xf]
    %v1946 = vld [vmem:[%s11 + $0xc] sm:$0xf]
    %v1947 = vpack.c.bf16 %v1942, %v1941
    %v1948 = vperm.slane %v45, 2
    %v1953 = vunpack.c.l.b16 %v1943
    %v1954 = vunpack.c.l.b16 %v1944
    %v1955 = vunpack.c.l.b16 %v1945
    %v1956 = vunpack.c.l.b16 %v1946
    %v1957 = vpack.c.b16 %v1954, %v1953
    %v1958 = vpack.c.b16 %v1956, %v1955
    %v1962 = vsel %vm141, %v1947, 0
    %1964 = vmatpush.bf16.msra.mxu0 0
    %1965 = vmatpush.bf16.msra.mxu0 0
    %1966 = vmatpush.bf16.msra.mxu0 0
    %1967 = vmatpush.bf16.msra.mxu0 0
    %1968 = vmatpush.bf16.msra.mxu0 0
    %1969 = vmatpush.bf16.msra.mxu0 0
    %1970 = vmatpush.bf16.msra.mxu0 %v1958
    %1971 = vmatpush.bf16.msra.mxu0 %v1957
    %1972 = vmatmul.bf16.gmra.mxu0 %v1962
    %v1973 = vpop.f32.mrf.mxu0
    %v1974 = vadd.f32 %v1948, %v1973
    %v1975 = vpop.f32.mrf.mxu0
    %v1976 = vadd.f32 %v1948, %v1975
    %1977 = vdwg.mxu0
    %1978 = vmax.xlane.f32.xlu0 %v1974
    %v1979 = vpop.xlane.xlu0 %1978
    %1980 = vmax.xlane.f32.xlu0 %v1976
    %v1981 = vpop.xlane.xlu0 %1980
    %v1982 = vsub.f32 %v1974, %v1979
    %v1983 = vsub.f32 %v1976, %v1981
    %v1984 = vmul.f32 %v1982, 1.442695
    %v1985 = vpow.pop %v1984
    %v1986 = vmul.f32 %v1983, 1.442695
    %v1987 = vpow.pop %v1986
    %1988 = vadd.xlane.f32.xlu0 %v1985
    %v1989 = vpop.xlane.xlu0 %1988
    %1990 = vadd.xlane.f32.xlu0 %v1987
    %v1991 = vpop.xlane.xlu0 %1990
    %v1992 = vrcp.pop %v1989
    %v1993 = vmul.f32 %v1989, %v1992
    %v1994 = vsub.f32 1.0, %v1993
    %v1995 = vmul.f32 %v1992, %v1994
    %v1996 = vadd.f32 %v1992, %v1995
    %vm1997 = vweird.f32 %v1989
    %vm1998 = vweird.f32 %v1992
    %vm1999 = vmor %vm1997, %vm1998
    %v2000 = vsel %vm1999, %v1992, %v1996
    %v2001 = vand.u32 2147483647, %v1989
    %vm2002 = vcmp.eq.f32.partialorder %v2001, 8.507059e+37
    %v2003 = vand.u32 %v1989, 2147483648
    %v2004 = vor.u32 1.1754944e-38, %v2003
    %v2005 = vsel %vm2002, %v2004, %v2000
    %v2006 = vmul.f32 %v1985, %v2005
    %v2007 = vrcp.pop %v1991
    %v2008 = vmul.f32 %v1991, %v2007
    %v2009 = vsub.f32 1.0, %v2008
    %v2010 = vmul.f32 %v2007, %v2009
    %v2011 = vadd.f32 %v2007, %v2010
    %vm2012 = vweird.f32 %v1991
    %vm2013 = vweird.f32 %v2007
    %vm2014 = vmor %vm2012, %vm2013
    %v2015 = vsel %vm2014, %v2007, %v2011
    %v2016 = vand.u32 2147483647, %v1991
    %vm2017 = vcmp.eq.f32.partialorder %v2016, 8.507059e+37
    %v2018 = vand.u32 %v1991, 2147483648
    %v2019 = vor.u32 1.1754944e-38, %v2018
    %v2020 = vsel %vm2017, %v2019, %v2015
    %v2021 = vmul.f32 %v1987, %v2020
    %2022 = vst [vmem:[#allocation2] sm:$0xff] %v2006
    %2023 = vst [vmem:[#allocation2 + $0x8] sm:$0xff] %v2021
    // Predicated region
    $region50: #{bert_lm_forward.1} parent=1 // pred_check
      _
    $region51: #{bert_lm_forward.1} parent=1 // pred_check_branch
      %2025 = sbr.rel (0) target = $region53
    $region52: #{bert_lm_forward.1} parent=1 // pred_region
      %2027 = vsyncadd [#allocation3], 0
      %s2028 = sshll.u32 [#allocation2], 4
      %s2029 = int_to_ptr.vmem [resolvable:$true] %s2028
      %s2030 = sshll.u32 %s12, 4
      %s2031 = int_to_ptr.hbm [resolvable:$true] %s2030
      %2036 = dma.vmem_to_hbm [thread:$0]  %s2029, 256, %s2031, [#allocation3], 128, 128, 8
    $region53: #{bert_lm_forward.1} parent=1 // pred_fallthru
      _
    // Predicated region
    $region54: #{bert_lm_forward.1} parent=1 // pred_check
      _
    $region55: #{bert_lm_forward.1} parent=1 // pred_check_branch
      %2038 = sbr.rel (0) target = $region57
    $region56: #{bert_lm_forward.1} parent=1 // pred_region
      %2040 = dma.done [#allocation3], 256
    $region57: #{bert_lm_forward.1} parent=1 // pred_fallthru
      _
    %2041 = vsyncpa [#allocation3], 1

</llo_original>
